<compile_context>
chip_gen: v5e
topology: v5e:2x2
jax: 0.10.0
libtpu: 0.0.40
codegen_flags: <defaults>
</compile_context>

<pallas_src>
import jax
import jax.numpy as jnp
from jax import lax
from jax.experimental import pallas as pl
from jax.experimental.pallas import tpu as pltpu


def _gate_f32(x):
    """elu(x) * sigmoid(x) with one shared exp and one approx reciprocal.

    en = exp(-|x|); sigmoid(x) = where(x>=0, 1, en) / (1 + en)  (stable form),
    elu(x) = where(x>=0, x, en - 1)  since en == exp(x) when x < 0.
    """
    en = jnp.exp(-jnp.abs(x))
    inv = pl.reciprocal(1.0 + en, approx=True)
    sig = jnp.where(x >= 0, 1.0, en) * inv
    elu = jnp.where(x >= 0, x, en - 1.0)
    return elu * sig


def _make_fused_downsample_kernel(bblk, ho, wo, cin, ch, cout):
    """Fused per-batch-block kernel.

    Ref shapes seen by the kernel (one batch block per grid step):
      x_ref  : (bblk, 4, ho+1, wo+1, cin) bf16   four stride-2 phases of the
                                                 zero-padded input; phase
                                                 2*p+q holds x_pad[2i+p, 2j+q].
      w1_ref : (9*cin, ch)  bf16                 tap-folded conv1 weights
      w2_ref : (9*ch, cout) bf16                 tap-folded conv2 weights
      o_ref  : (1, cout, bblk*ho*wo) f32         lane-dense (M in lanes)
    """
    m = bblk * ho * wo

    def kernel(x_ref, w1_ref, w2_ref, o_ref):
        xv = x_ref[...]                                  # (bblk,4,ho+1,wo+1,cin)

        # ---- GatedConv #1: 3x3, stride 2, pad 1 — taps folded into one dot.
        # Output pixel (i,j), tap (kh,kw) reads x_pad[2i+kh, 2j+kw].  With
        # kh=2a+p, kw=2b+q that is phase (p,q) at (i+a, j+b): a plain shifted
        # window of a phase, no strided loads.
        taps1 = []
        for kh in range(3):
            a, p = divmod(kh, 2)
            for kw in range(3):
                b, q = divmod(kw, 2)
                t = xv[:, 2 * p + q, a:a + ho, b:b + wo, :]   # (bblk,ho,wo,cin)
                taps1.append(t.reshape(m, cin))
        lhs1 = jnp.concatenate(taps1, axis=-1)                # (m, 9*cin) bf16
        acc1 = jnp.dot(lhs1, w1_ref[...],
                       preferred_element_type=jnp.float32)    # (m, ch) f32
        h = _gate_f32(acc1)                                   # f32 gating

        # ---- GatedConv #2: 3x3, stride 1, pad 1 — value-level halo, one dot.
        h4 = h.astype(jnp.bfloat16).reshape(bblk, ho, wo, ch)
        zr = jnp.zeros((bblk, 1, wo, ch), jnp.bfloat16)
        hp = jnp.concatenate([zr, h4, zr], axis=1)            # (bblk,ho+2,wo,ch)
        zc = jnp.zeros((bblk, ho + 2, 1, ch), jnp.bfloat16)
        hp = jnp.concatenate([zc, hp, zc], axis=2)            # (bblk,ho+2,wo+2,ch)
        taps2 = [hp[:, kh:kh + ho, kw:kw + wo, :].reshape(m, ch)
                 for kh in range(3) for kw in range(3)]
        lhs2 = jnp.concatenate(taps2, axis=-1)                # (m, 9*ch) bf16
        acc2 = jnp.dot(lhs2, w2_ref[...],
                       preferred_element_type=jnp.float32)    # (m, cout) f32
        out = _gate_f32(acc2)

        # Lane-dense store: (cout, m) with batch*spatial along lanes.
        o_ref[0] = out.T.astype(o_ref.dtype)

    return kernel


def _pick_batch_block(n, ho, wo):
    """Grow matmul M (= bblk*ho*wo) toward 256 while keeping >= 2 grid steps."""
    target = max(1, -(-256 // (ho * wo)))
    best = 1
    for b in range(1, n + 1):
        if n % b != 0:
            continue
        if n >= 2 and n // b < 2:          # keep both v7x TensorCores busy
            continue
        if b <= target:
            best = b
    return best


def downsample_forward(x_nchw, w1_hwio, w2_hwio):
    """DownSample forward: NCHW input, HWIO weights (k=3, no bias)."""
    n, cin, h, w = x_nchw.shape
    assert h % 2 == 0 and w % 2 == 0, "kernel assumes even spatial dims"
    k1, _, cin1, ch = w1_hwio.shape
    k2, _, ch2, cout = w2_hwio.shape
    assert (k1, k2) == (3, 3) and cin1 == cin and ch2 == ch
    ho, wo = h // 2, w // 2                  # conv1 (s=2,p=1) out = conv2 out
    php, pwp = ho + 1, wo + 1                # per-phase spatial extents

    bblk = _pick_batch_block(n, ho, wo)
    steps = n // bblk
    m = bblk * ho * wo

    # One fused XLA pass over the (tiny) input: bf16 cast, NCHW->NHWC, +1 zero
    # halo, stride-2 phase split (exact repartition, no data expansion).
    x = jnp.transpose(x_nchw.astype(jnp.bfloat16), (0, 2, 3, 1))
    x_pad = jnp.pad(x, ((0, 0), (1, 1), (1, 1), (0, 0)))
    x_ph = jnp.stack([x_pad[:, p::2, q::2, :] for p in (0, 1) for q in (0, 1)],
                     axis=1)                               # (n, 4, php, pwp, cin)

    # Tap-folded weight matrices (columns of lhs match (tap, channel) order).
    w1 = w1_hwio.reshape(9 * cin, ch).astype(jnp.bfloat16)
    w2 = w2_hwio.reshape(9 * ch, cout).astype(jnp.bfloat16)

    kernel = _make_fused_downsample_kernel(bblk, ho, wo, cin, ch, cout)

    out = pl.pallas_call(
        kernel,
        out_shape=jax.ShapeDtypeStruct((steps, cout, m), jnp.float32),
        grid_spec=pltpu.PrefetchScalarGridSpec(
            num_scalar_prefetch=0,
            grid=(steps,),
            in_specs=[
                # one batch block's 4 phases per step
                pl.BlockSpec((bblk, 4, php, pwp, cin),
                             lambda i: (i, 0, 0, 0, 0)),
                # weights: full, VMEM-resident across all steps
                pl.BlockSpec((9 * cin, ch), lambda i: (0, 0)),
                pl.BlockSpec((9 * ch, cout), lambda i: (0, 0)),
            ],
            out_specs=pl.BlockSpec((1, cout, m), lambda i: (i, 0, 0)),
        ),
        compiler_params=pltpu.CompilerParams(
            dimension_semantics=("parallel",)),
    )(x_ph, w1, w2)

    # (steps, cout, bblk*ho*wo) -> (n, cout, ho, wo)
    out = out.reshape(steps, cout, bblk, ho, wo)
    out = jnp.transpose(out, (0, 2, 1, 3, 4)).reshape(n, cout, ho, wo)
    return out


# ----------------------------- JAX references --------------------------------
def _ref_gated_conv(x_nhwc, w_hwio, stride):
    pad = (w_hwio.shape[0] - 1) // 2
    c = lax.conv_general_dilated(
        x_nhwc, w_hwio, window_strides=(stride, stride),
        padding=[(pad, pad), (pad, pad)],
        dimension_numbers=("NHWC", "HWIO", "NHWC"),
        preferred_element_type=jnp.float32)
    return jax.nn.elu(c) * jax.nn.sigmoid(c)


def _ref_downsample(x_nchw, w1, w2, dtype=jnp.float32):
    x = jnp.transpose(x_nchw, (0, 2, 3, 1)).astype(dtype)
    h = _ref_gated_conv(x, w1.astype(dtype), 2).astype(dtype)
    y = _ref_gated_conv(h, w2.astype(dtype), 1)
    return jnp.transpose(y, (0, 3, 1, 2)).astype(jnp.float32)


if __name__ == "__main__":
    key = jax.random.PRNGKey(0)
    k0, k1, k2 = jax.random.split(key, 3)

    # DownSample(in_channels=4, out_channels=8) -> hidden_channels = 8
    N, Cin, H, W = 2, 4, 16, 16
    hidden, Cout = 8, 8

    x = jax.random.normal(k0, (N, Cin, H, W), dtype=jnp.float32)
    # PyTorch conv weight (O, I, kh, kw) <-> HWIO layout used here
    w1 = jax.random.normal(k1, (3, 3, Cin, hidden), dtype=jnp.float32) * 0.1
    w2 = jax.random.normal(k2, (3, 3, hidden, Cout), dtype=jnp.float32) * 0.1

    out = jax.jit(downsample_forward)(x, w1, w2)
    out = jax.block_until_ready(out)
    assert out.shape == (N, Cout, H // 2, W // 2), out.shape

    # Check vs. a reference that mirrors the kernel's bf16 MXU operands
    # (tolerance covers the shared-exp / approx-reciprocal gate).
    ref_bf16 = _ref_downsample(x, w1, w2, dtype=jnp.bfloat16)
    assert jnp.allclose(out, ref_bf16, atol=1e-2, rtol=1e-2), \
        float(jnp.max(jnp.abs(out - ref_bf16)))

    # Loose check vs. the full-f32 module semantics (bf16 MXU operands).
    ref_f32 = _ref_downsample(x, w1, w2, dtype=jnp.float32)
    assert jnp.allclose(out, ref_f32, atol=5e-2, rtol=5e-2), \
        float(jnp.max(jnp.abs(out - ref_f32)))

    print("KERNEL_OK")
</pallas_src>

<mosaic_0001>
module attributes {stable_mosaic.version = 11 : i64} {
  func.func @kernel(%arg0: i32, %arg1: memref<1x4x9x9x4xbf16, #tpu.memory_space<vmem>>, %arg2: memref<36x8xbf16, #tpu.memory_space<vmem>>, %arg3: memref<72x8xbf16, #tpu.memory_space<vmem>>, %arg4: memref<1x8x64xf32, #tpu.memory_space<vmem>>) attributes {dimension_semantics = [#tpu.dimension_semantics<parallel>], iteration_bounds = array<i64: 2>, scalar_prefetch = 0 : i64, scratch_operands = 0 : i64, tpu.core_type = #tpu.core_type<tc>, window_params = [{transform_indices = @transform_0, window_bounds = array<i64: 1, 4, 9, 9, 4>}, {pipeline_mode = #tpu.pipeline_mode<synchronous>, transform_indices = @transform_1, window_bounds = array<i64: 36, 8>}, {pipeline_mode = #tpu.pipeline_mode<synchronous>, transform_indices = @transform_2, window_bounds = array<i64: 72, 8>}, {transform_indices = @transform_3, window_bounds = array<i64: 1, 8, 64>}]} {
    %c0 = arith.constant 0 : index
    %c0_0 = arith.constant 0 : index
    %c0_1 = arith.constant 0 : index
    %c0_2 = arith.constant 0 : index
    %c0_3 = arith.constant 0 : index
    %0 = vector.load %arg1[%c0, %c0_0, %c0_1, %c0_2, %c0_3] : memref<1x4x9x9x4xbf16, #tpu.memory_space<vmem>>, vector<1x4x9x9x4xbf16>
    %1 = vector.extract_strided_slice %0 {offsets = [0, 0, 0, 0, 0], sizes = [1, 1, 8, 8, 4], strides = [1, 1, 1, 1, 1]} : vector<1x4x9x9x4xbf16> to vector<1x1x8x8x4xbf16>
    %2 = vector.shape_cast %1 : vector<1x1x8x8x4xbf16> to vector<1x8x8x4xbf16>
    %3 = vector.shape_cast %2 : vector<1x8x8x4xbf16> to vector<64x4xbf16>
    %4 = vector.extract_strided_slice %0 {offsets = [0, 1, 0, 0, 0], sizes = [1, 1, 8, 8, 4], strides = [1, 1, 1, 1, 1]} : vector<1x4x9x9x4xbf16> to vector<1x1x8x8x4xbf16>
    %5 = vector.shape_cast %4 : vector<1x1x8x8x4xbf16> to vector<1x8x8x4xbf16>
    %6 = vector.shape_cast %5 : vector<1x8x8x4xbf16> to vector<64x4xbf16>
    %7 = vector.extract_strided_slice %0 {offsets = [0, 0, 0, 1, 0], sizes = [1, 1, 8, 8, 4], strides = [1, 1, 1, 1, 1]} : vector<1x4x9x9x4xbf16> to vector<1x1x8x8x4xbf16>
    %8 = vector.shape_cast %7 : vector<1x1x8x8x4xbf16> to vector<1x8x8x4xbf16>
    %9 = vector.shape_cast %8 : vector<1x8x8x4xbf16> to vector<64x4xbf16>
    %10 = vector.extract_strided_slice %0 {offsets = [0, 2, 0, 0, 0], sizes = [1, 1, 8, 8, 4], strides = [1, 1, 1, 1, 1]} : vector<1x4x9x9x4xbf16> to vector<1x1x8x8x4xbf16>
    %11 = vector.shape_cast %10 : vector<1x1x8x8x4xbf16> to vector<1x8x8x4xbf16>
    %12 = vector.shape_cast %11 : vector<1x8x8x4xbf16> to vector<64x4xbf16>
    %13 = vector.extract_strided_slice %0 {offsets = [0, 3, 0, 0, 0], sizes = [1, 1, 8, 8, 4], strides = [1, 1, 1, 1, 1]} : vector<1x4x9x9x4xbf16> to vector<1x1x8x8x4xbf16>
    %14 = vector.shape_cast %13 : vector<1x1x8x8x4xbf16> to vector<1x8x8x4xbf16>
    %15 = vector.shape_cast %14 : vector<1x8x8x4xbf16> to vector<64x4xbf16>
    %16 = vector.extract_strided_slice %0 {offsets = [0, 2, 0, 1, 0], sizes = [1, 1, 8, 8, 4], strides = [1, 1, 1, 1, 1]} : vector<1x4x9x9x4xbf16> to vector<1x1x8x8x4xbf16>
    %17 = vector.shape_cast %16 : vector<1x1x8x8x4xbf16> to vector<1x8x8x4xbf16>
    %18 = vector.shape_cast %17 : vector<1x8x8x4xbf16> to vector<64x4xbf16>
    %19 = vector.extract_strided_slice %0 {offsets = [0, 0, 1, 0, 0], sizes = [1, 1, 8, 8, 4], strides = [1, 1, 1, 1, 1]} : vector<1x4x9x9x4xbf16> to vector<1x1x8x8x4xbf16>
    %20 = vector.shape_cast %19 : vector<1x1x8x8x4xbf16> to vector<1x8x8x4xbf16>
    %21 = vector.shape_cast %20 : vector<1x8x8x4xbf16> to vector<64x4xbf16>
    %22 = vector.extract_strided_slice %0 {offsets = [0, 1, 1, 0, 0], sizes = [1, 1, 8, 8, 4], strides = [1, 1, 1, 1, 1]} : vector<1x4x9x9x4xbf16> to vector<1x1x8x8x4xbf16>
    %23 = vector.shape_cast %22 : vector<1x1x8x8x4xbf16> to vector<1x8x8x4xbf16>
    %24 = vector.shape_cast %23 : vector<1x8x8x4xbf16> to vector<64x4xbf16>
    %25 = vector.extract_strided_slice %0 {offsets = [0, 0, 1, 1, 0], sizes = [1, 1, 8, 8, 4], strides = [1, 1, 1, 1, 1]} : vector<1x4x9x9x4xbf16> to vector<1x1x8x8x4xbf16>
    %26 = vector.shape_cast %25 : vector<1x1x8x8x4xbf16> to vector<1x8x8x4xbf16>
    %27 = vector.shape_cast %26 : vector<1x8x8x4xbf16> to vector<64x4xbf16>
    %28 = tpu.concatenate %3, %6, %9, %12, %15, %18, %21, %24, %27 in 1 : vector<64x4xbf16>, vector<64x4xbf16>, vector<64x4xbf16>, vector<64x4xbf16>, vector<64x4xbf16>, vector<64x4xbf16>, vector<64x4xbf16>, vector<64x4xbf16>, vector<64x4xbf16> -> vector<64x36xbf16>
    %c0_4 = arith.constant 0 : index
    %c0_5 = arith.constant 0 : index
    %29 = vector.load %arg2[%c0_4, %c0_5] : memref<36x8xbf16, #tpu.memory_space<vmem>>, vector<36x8xbf16>
    %cst = arith.constant dense<0.000000e+00> : vector<64x8xf32>
    %30 = tpu.matmul %28, %29, %cst {dimension_numbers = #tpu.dot_dimension_numbers<[1], [0], [0], [1], [0, 0, 1, 1], [], []>} : vector<64x36xbf16>, vector<36x8xbf16>, vector<64x8xf32> -> vector<64x8xf32>
    %31 = math.absf %30 : vector<64x8xf32>
    %cst_6 = arith.constant 0.000000e+00 : f32
    %32 = vector.broadcast %cst_6 : f32 to vector<64x8xf32>
    %33 = arith.subf %32, %31 : vector<64x8xf32>
    %34 = math.exp %33 : vector<64x8xf32>
    %cst_7 = arith.constant 1.000000e+00 : f32
    %35 = vector.broadcast %cst_7 : f32 to vector<64x8xf32>
    %36 = arith.addf %35, %34 : vector<64x8xf32>
    %37 = tpu.reciprocal %36 {approx = true} : vector<64x8xf32> -> vector<64x8xf32>
    %cst_8 = arith.constant 0.000000e+00 : f32
    %38 = vector.broadcast %cst_8 : f32 to vector<64x8xf32>
    %39 = arith.cmpf oge, %30, %38 : vector<64x8xf32>
    %cst_9 = arith.constant 1.000000e+00 : f32
    %40 = vector.broadcast %cst_9 : f32 to vector<64x8xf32>
    %41 = arith.select %39, %40, %34 : vector<64x8xi1>, vector<64x8xf32>
    %42 = arith.mulf %41, %37 : vector<64x8xf32>
    %cst_10 = arith.constant 0.000000e+00 : f32
    %43 = vector.broadcast %cst_10 : f32 to vector<64x8xf32>
    %44 = arith.cmpf oge, %30, %43 : vector<64x8xf32>
    %cst_11 = arith.constant 1.000000e+00 : f32
    %45 = vector.broadcast %cst_11 : f32 to vector<64x8xf32>
    %46 = arith.subf %34, %45 : vector<64x8xf32>
    %47 = arith.select %44, %30, %46 : vector<64x8xi1>, vector<64x8xf32>
    %48 = arith.mulf %47, %42 : vector<64x8xf32>
    %49 = arith.truncf %48 : vector<64x8xf32> to vector<64x8xbf16>
    %50 = vector.shape_cast %49 : vector<64x8xbf16> to vector<1x8x8x8xbf16>
    %cst_12 = arith.constant 0.000000e+00 : bf16
    %51 = vector.broadcast %cst_12 : bf16 to vector<1x1x8x8xbf16>
    %52 = tpu.concatenate %51, %50, %51 in 1 : vector<1x1x8x8xbf16>, vector<1x8x8x8xbf16>, vector<1x1x8x8xbf16> -> vector<1x10x8x8xbf16>
    %cst_13 = arith.constant 0.000000e+00 : bf16
    %53 = vector.broadcast %cst_13 : bf16 to vector<1x10x1x8xbf16>
    %54 = tpu.concatenate %53, %52, %53 in 2 : vector<1x10x1x8xbf16>, vector<1x10x8x8xbf16>, vector<1x10x1x8xbf16> -> vector<1x10x10x8xbf16>
    %55 = vector.extract_strided_slice %54 {offsets = [0, 0, 0, 0], sizes = [1, 8, 8, 8], strides = [1, 1, 1, 1]} : vector<1x10x10x8xbf16> to vector<1x8x8x8xbf16>
    %56 = vector.shape_cast %55 : vector<1x8x8x8xbf16> to vector<64x8xbf16>
    %57 = vector.extract_strided_slice %54 {offsets = [0, 0, 1, 0], sizes = [1, 8, 8, 8], strides = [1, 1, 1, 1]} : vector<1x10x10x8xbf16> to vector<1x8x8x8xbf16>
    %58 = vector.shape_cast %57 : vector<1x8x8x8xbf16> to vector<64x8xbf16>
    %59 = vector.extract_strided_slice %54 {offsets = [0, 0, 2, 0], sizes = [1, 8, 8, 8], strides = [1, 1, 1, 1]} : vector<1x10x10x8xbf16> to vector<1x8x8x8xbf16>
    %60 = vector.shape_cast %59 : vector<1x8x8x8xbf16> to vector<64x8xbf16>
    %61 = vector.extract_strided_slice %54 {offsets = [0, 1, 0, 0], sizes = [1, 8, 8, 8], strides = [1, 1, 1, 1]} : vector<1x10x10x8xbf16> to vector<1x8x8x8xbf16>
    %62 = vector.shape_cast %61 : vector<1x8x8x8xbf16> to vector<64x8xbf16>
    %63 = vector.extract_strided_slice %54 {offsets = [0, 1, 1, 0], sizes = [1, 8, 8, 8], strides = [1, 1, 1, 1]} : vector<1x10x10x8xbf16> to vector<1x8x8x8xbf16>
    %64 = vector.shape_cast %63 : vector<1x8x8x8xbf16> to vector<64x8xbf16>
    %65 = vector.extract_strided_slice %54 {offsets = [0, 1, 2, 0], sizes = [1, 8, 8, 8], strides = [1, 1, 1, 1]} : vector<1x10x10x8xbf16> to vector<1x8x8x8xbf16>
    %66 = vector.shape_cast %65 : vector<1x8x8x8xbf16> to vector<64x8xbf16>
    %67 = vector.extract_strided_slice %54 {offsets = [0, 2, 0, 0], sizes = [1, 8, 8, 8], strides = [1, 1, 1, 1]} : vector<1x10x10x8xbf16> to vector<1x8x8x8xbf16>
    %68 = vector.shape_cast %67 : vector<1x8x8x8xbf16> to vector<64x8xbf16>
    %69 = vector.extract_strided_slice %54 {offsets = [0, 2, 1, 0], sizes = [1, 8, 8, 8], strides = [1, 1, 1, 1]} : vector<1x10x10x8xbf16> to vector<1x8x8x8xbf16>
    %70 = vector.shape_cast %69 : vector<1x8x8x8xbf16> to vector<64x8xbf16>
    %71 = vector.extract_strided_slice %54 {offsets = [0, 2, 2, 0], sizes = [1, 8, 8, 8], strides = [1, 1, 1, 1]} : vector<1x10x10x8xbf16> to vector<1x8x8x8xbf16>
    %72 = vector.shape_cast %71 : vector<1x8x8x8xbf16> to vector<64x8xbf16>
    %73 = tpu.concatenate %56, %58, %60, %62, %64, %66, %68, %70, %72 in 1 : vector<64x8xbf16>, vector<64x8xbf16>, vector<64x8xbf16>, vector<64x8xbf16>, vector<64x8xbf16>, vector<64x8xbf16>, vector<64x8xbf16>, vector<64x8xbf16>, vector<64x8xbf16> -> vector<64x72xbf16>
    %c0_14 = arith.constant 0 : index
    %c0_15 = arith.constant 0 : index
    %74 = vector.load %arg3[%c0_14, %c0_15] : memref<72x8xbf16, #tpu.memory_space<vmem>>, vector<72x8xbf16>
    %cst_16 = arith.constant dense<0.000000e+00> : vector<64x8xf32>
    %75 = tpu.matmul %73, %74, %cst_16 {dimension_numbers = #tpu.dot_dimension_numbers<[1], [0], [0], [1], [0, 0, 1, 1], [], []>} : vector<64x72xbf16>, vector<72x8xbf16>, vector<64x8xf32> -> vector<64x8xf32>
    %76 = math.absf %75 : vector<64x8xf32>
    %cst_17 = arith.constant 0.000000e+00 : f32
    %77 = vector.broadcast %cst_17 : f32 to vector<64x8xf32>
    %78 = arith.subf %77, %76 : vector<64x8xf32>
    %79 = math.exp %78 : vector<64x8xf32>
    %cst_18 = arith.constant 1.000000e+00 : f32
    %80 = vector.broadcast %cst_18 : f32 to vector<64x8xf32>
    %81 = arith.addf %80, %79 : vector<64x8xf32>
    %82 = tpu.reciprocal %81 {approx = true} : vector<64x8xf32> -> vector<64x8xf32>
    %cst_19 = arith.constant 0.000000e+00 : f32
    %83 = vector.broadcast %cst_19 : f32 to vector<64x8xf32>
    %84 = arith.cmpf oge, %75, %83 : vector<64x8xf32>
    %cst_20 = arith.constant 1.000000e+00 : f32
    %85 = vector.broadcast %cst_20 : f32 to vector<64x8xf32>
    %86 = arith.select %84, %85, %79 : vector<64x8xi1>, vector<64x8xf32>
    %87 = arith.mulf %86, %82 : vector<64x8xf32>
    %cst_21 = arith.constant 0.000000e+00 : f32
    %88 = vector.broadcast %cst_21 : f32 to vector<64x8xf32>
    %89 = arith.cmpf oge, %75, %88 : vector<64x8xf32>
    %cst_22 = arith.constant 1.000000e+00 : f32
    %90 = vector.broadcast %cst_22 : f32 to vector<64x8xf32>
    %91 = arith.subf %79, %90 : vector<64x8xf32>
    %92 = arith.select %89, %75, %91 : vector<64x8xi1>, vector<64x8xf32>
    %93 = arith.mulf %92, %87 : vector<64x8xf32>
    %94 = tpu.transpose %93, [1, 0] : vector<64x8xf32> -> vector<8x64xf32>
    %c0_23 = arith.constant 0 : index
    %c0_24 = arith.constant 0 : index
    %c0_25 = arith.constant 0 : index
    %95 = vector.load %arg4[%c0_23, %c0_24, %c0_25] : memref<1x8x64xf32, #tpu.memory_space<vmem>>, vector<1x8x64xf32>
    %96 = vector.shape_cast %95 : vector<1x8x64xf32> to vector<8x64xf32>
    %97 = vector.shape_cast %94 : vector<8x64xf32> to vector<1x8x64xf32>
    tpu.vector_store %arg4[%c0_23, %c0_24, %c0_25], %97 {strides = array<i32>} : memref<1x8x64xf32, #tpu.memory_space<vmem>>, vector<1x8x64xf32>,
    return
  }
  func.func @transform_0(%arg0: i32) -> (i32, i32, i32, i32, i32) {
    %c0_i32 = arith.constant 0 : i32
    %c0_i32_0 = arith.constant 0 : i32
    %c0_i32_1 = arith.constant 0 : i32
    %c0_i32_2 = arith.constant 0 : i32
    %c0_i32_3 = arith.constant 0 : i32
    return %arg0, %c0_i32, %c0_i32_0, %c0_i32_1, %c0_i32_2 : i32, i32, i32, i32, i32
  }
  func.func @transform_1(%arg0: i32) -> (i32, i32) {
    %c0_i32 = arith.constant 0 : i32
    %c0_i32_0 = arith.constant 0 : i32
    %c0_i32_1 = arith.constant 0 : i32
    return %c0_i32, %c0_i32_0 : i32, i32
  }
  func.func @transform_2(%arg0: i32) -> (i32, i32) {
    %c0_i32 = arith.constant 0 : i32
    %c0_i32_0 = arith.constant 0 : i32
    %c0_i32_1 = arith.constant 0 : i32
    return %c0_i32, %c0_i32_0 : i32, i32
  }
  func.func @transform_3(%arg0: i32) -> (i32, i32, i32) {
    %c0_i32 = arith.constant 0 : i32
    %c0_i32_0 = arith.constant 0 : i32
    %c0_i32_1 = arith.constant 0 : i32
    return %arg0, %c0_i32, %c0_i32_0 : i32, i32, i32
  }
}

</mosaic_0001>

<llo_original>
// kernel: downsample_forward.1
$region0: #{downsample_forward.1}
  #allocation0 [shape = 'u32[]', space=smem, size = 0x4, offset = 0x4, fixed_abs, tag = 'smem constant byte address 0x4 - core index']
  #allocation1 [shape = 'u32[72,128]{1,0:T(1,128)}', space=vmem, size = 0x9000, scoped, tag = 'internal scratch']
  %s0 = inlined_call_operand.vmem [shape: bf16[2,4,9,9,4], index: 0, kind: input, shape index: {}]
  %s1 = inlined_call_operand.vmem [shape: bf16[36,8], index: 1, kind: input, shape index: {}]
  %s2 = inlined_call_operand.vmem [shape: bf16[72,8], index: 2, kind: input, shape index: {}]
  %s3 = inlined_call_operand.vmem [shape: f32[2,8,64], index: 3, kind: output, shape index: {}]
  %s4 = sld [smem:[#allocation0]]
  $region45: #{downsample_forward.1} parent=0
    _
  %s6 = ssub.s32 1, %s4
  %s7 = scalar_select 0, %s6, %s4
  loop: start=0, step=1, limit=4
  $region2: #{downsample_forward.1} parent=0 // loop_pre_header
    _
  $region3: #{downsample_forward.1} parent=0 // loop_header
    %s9 = sphi 0, %s13
    %p10 = scmp.ge.s32.totalorder %s9, 4
    %s19 = sphi 0, %s21
    %s22 = sphi 0, %s19
    %s23 = sphi 0, %s22
    %s39 = sphi 0, %s23
    %s43 = sphi 0, %s43
    %s45 = sphi 0, %s43
    %s46 = sphi 0, %s45
    %s60 = sphi 0, %s46
    %s64 = sphi 0, %s64
    %s66 = sphi 0, %s64
    %s67 = sphi 0, %s66
    %s81 = sphi 0, %s67
    %s87 = sphi 0, %s89
    %s90 = sphi 0, %s87
    %s91 = sphi 0, %s90
    %s107 = sphi 0, %s91
  $region4: #{downsample_forward.1} parent=0 // loop_header_branch
    %12 = sbr.rel (%p10) target = $region8
  $region5: #{downsample_forward.1} parent=0 // loop_body
    %s14 = ssub.s32 %s9, 1
    %s15 = ssub.s32 %s9, 2
    %s16 = sadd.s32 %s9, 1
    %s17 = ssub.s32 %s9, %s16
    %p18 = scmp.eq.s32.totalorder %s17, 0
    %s20 = sadd.s32 %s19, 1
    %s21 = scalar_select %p18, %s19, %s20
    %p24 = pneg %p18
    %p25 = scmp.eq.s32.totalorder %s9, 1
    %p26 = por %p24, %p25
    %p27 = scmp.ne.s32.totalorder %s19, %s22
    %p28 = scmp.eq.s32.totalorder %s9, 0
    %p29 = por %p27, %p28
    %p30 = scmp.ne.s32.totalorder %s19, %s22
    %p31 = scmp.eq.s32.totalorder %s14, 1
    %p32 = por %p30, %p31
    %p33 = scmp.ne.s32.totalorder %s22, %s23
    %p34 = scmp.eq.s32.totalorder %s14, 0
    %p35 = por %p33, %p34
    %p36 = scmp.ne.s32.totalorder %s22, %s23
    %p37 = scmp.eq.s32.totalorder %s15, 1
    %p38 = por %p36, %p37
    %p40 = scmp.ne.s32.totalorder %s23, %s39
    %p41 = scmp.eq.s32.totalorder %s15, 0
    %p42 = por %p40, %p41
    %s44 = sadd.s32 %s43, 1
    %p47 = scmp.eq.s32.totalorder %s9, 1
    %p48 = scmp.ne.s32.totalorder %s43, %s45
    %p49 = scmp.eq.s32.totalorder %s9, 0
    %p50 = por %p48, %p49
    %p51 = scmp.ne.s32.totalorder %s43, %s45
    %p52 = scmp.eq.s32.totalorder %s14, 1
    %p53 = por %p51, %p52
    %p54 = scmp.ne.s32.totalorder %s45, %s46
    %p55 = scmp.eq.s32.totalorder %s14, 0
    %p56 = por %p54, %p55
    %p57 = scmp.ne.s32.totalorder %s45, %s46
    %p58 = scmp.eq.s32.totalorder %s15, 1
    %p59 = por %p57, %p58
    %p61 = scmp.ne.s32.totalorder %s46, %s60
    %p62 = scmp.eq.s32.totalorder %s15, 0
    %p63 = por %p61, %p62
    %s65 = sadd.s32 %s64, 1
    %p68 = scmp.eq.s32.totalorder %s9, 1
    %p69 = scmp.ne.s32.totalorder %s64, %s66
    %p70 = scmp.eq.s32.totalorder %s9, 0
    %p71 = por %p69, %p70
    %p72 = scmp.ne.s32.totalorder %s64, %s66
    %p73 = scmp.eq.s32.totalorder %s14, 1
    %p74 = por %p72, %p73
    %p75 = scmp.ne.s32.totalorder %s66, %s67
    %p76 = scmp.eq.s32.totalorder %s14, 0
    %p77 = por %p75, %p76
    %p78 = scmp.ne.s32.totalorder %s66, %s67
    %p79 = scmp.eq.s32.totalorder %s15, 1
    %p80 = por %p78, %p79
    %p82 = scmp.ne.s32.totalorder %s67, %s81
    %p83 = scmp.eq.s32.totalorder %s15, 0
    %p84 = por %p82, %p83
    %s85 = ssub.s32 %s9, %s16
    %p86 = scmp.eq.s32.totalorder %s85, 0
    %s88 = sadd.s32 %s87, 1
    %s89 = scalar_select %p86, %s87, %s88
    %p92 = pneg %p86
    %p93 = scmp.eq.s32.totalorder %s9, 1
    %p94 = por %p92, %p93
    %p95 = scmp.ne.s32.totalorder %s87, %s90
    %p96 = scmp.eq.s32.totalorder %s9, 0
    %p97 = por %p95, %p96
    %p98 = scmp.ne.s32.totalorder %s87, %s90
    %p99 = scmp.eq.s32.totalorder %s14, 1
    %p100 = por %p98, %p99
    %p101 = scmp.ne.s32.totalorder %s90, %s91
    %p102 = scmp.eq.s32.totalorder %s14, 0
    %p103 = por %p101, %p102
    %p104 = scmp.ne.s32.totalorder %s90, %s91
    %p105 = scmp.eq.s32.totalorder %s15, 1
    %p106 = por %p104, %p105
    %p108 = scmp.ne.s32.totalorder %s91, %s107
    %p109 = scmp.eq.s32.totalorder %s15, 0
    %p110 = por %p108, %p109
    %p111 = scmp.le.s32.totalorder 1, %s9
    %p112 = scmp.lt.s32.totalorder %s9, 3
    %p113 = pnand %p111, %p112
    %p114 = pneg %p113
    // Predicated region
    $region9: #{downsample_forward.1} parent=5 // pred_check
      _
    $region10: #{downsample_forward.1} parent=5 // pred_check_branch
      %116 = sbr.rel (%p113) target = $region12
    $region11: #{downsample_forward.1} parent=5 // pred_region
      %s117 = ssub.s32 %s9, 1
      // Predicated region
      $region13: #{downsample_forward.1} parent=11 // pred_check
        %p118 = pneg %p56
      $region14: #{downsample_forward.1} parent=11 // pred_check_branch
        %120 = sbr.rel (%p118) target = $region16
      $region15: #{downsample_forward.1} parent=11 // pred_region
        _
      $region16: #{downsample_forward.1} parent=11 // pred_fallthru
        _
      // Predicated region
      $region17: #{downsample_forward.1} parent=11 // pred_check
        %p121 = pneg %p77
      $region18: #{downsample_forward.1} parent=11 // pred_check_branch
        %123 = sbr.rel (%p121) target = $region20
      $region19: #{downsample_forward.1} parent=11 // pred_region
        _
      $region20: #{downsample_forward.1} parent=11 // pred_fallthru
        _
    $region12: #{downsample_forward.1} parent=5 // pred_fallthru
      _
    %p124 = scmp.lt.s32.totalorder %s9, 2
    // Predicated region
    $region21: #{downsample_forward.1} parent=5 // pred_check
      %p125 = pneg %p124
    $region22: #{downsample_forward.1} parent=5 // pred_check_branch
      %127 = sbr.rel (%p125) target = $region24
    $region23: #{downsample_forward.1} parent=5 // pred_region
      // Predicated region
      $region25: #{downsample_forward.1} parent=23 // pred_check
        %p128 = pneg %p29
      $region26: #{downsample_forward.1} parent=23 // pred_check_branch
        %130 = sbr.rel (%p128) target = $region28
      $region27: #{downsample_forward.1} parent=23 // pred_region
        %p131 = scmp.lt.s32.totalorder %s9, 1
        %s132 = scalar_select %p131, %s9, 1
        %s133 = smul.addr %s132, 72
        %s134 = smul.addr %s133, 4
        %s135 = scalar_lea.vmem %s0, %s134
      $region28: #{downsample_forward.1} parent=23 // pred_fallthru
        _
    $region24: #{downsample_forward.1} parent=5 // pred_fallthru
      _
    %p136 = scmp.le.s32.totalorder 1, %s9
    %p137 = scmp.lt.s32.totalorder %s9, 3
    %p138 = pnand %p136, %p137
    %p139 = pneg %p138
    // Predicated region
    $region29: #{downsample_forward.1} parent=5 // pred_check
      _
    $region30: #{downsample_forward.1} parent=5 // pred_check_branch
      %141 = sbr.rel (%p138) target = $region32
    $region31: #{downsample_forward.1} parent=5 // pred_region
      %s142 = ssub.s32 %s9, 1
      %p143 = scmp.lt.s32.totalorder %s14, 1
      %s144 = scalar_select %p143, %s14, 1
      %s145 = smul.addr %s144, 72
      %s146 = smul.addr %s145, 4
      %s147 = scalar_lea.vmem %s0, %s146
      %p148 = pneg %p35
      %p149 = pneg %p32
      %p150 = pneg %p56
      %p151 = pneg %p53
      %p152 = pneg %p77
      %p153 = pneg %p74
      %p154 = pneg %p103
      %p155 = pneg %p100
      %p156 = scmp.lt.s32.totalorder %s14, 1
      %s157 = scalar_select %p156, %s14, 1
      %s158 = smul.addr %s157, 8
      %s159 = scalar_lea.vmem %s3, %s158
      %p160 = scmp.lt.s32.totalorder %s14, 1
      %s161 = scalar_select %p160, %s14, 1
      %s162 = smul.addr %s161, 72
      %s163 = smul.addr %s162, 4
      %s164 = scalar_lea.vmem %s0, %s163
      %p165 = scmp.lt.s32.totalorder %s14, 1
      %s166 = scalar_select %p165, %s14, 1
      %s167 = smul.addr %s166, 8
      %s168 = scalar_lea.vmem %s3, %s167
      %v170 = vld [vmem:[%s164] sm:$0xf]
      %v171 = vld [vmem:[%s164 + $0x4] sm:$0x1]
      %v172 = vld [vmem:[%s164 + $0x8] sm:$0xf]
      %v173 = vld [vmem:[%s164 + $0xc] sm:$0x1]
      %v174 = vld [vmem:[%s164 + $0x10] sm:$0xf]
      %v175 = vld [vmem:[%s164 + $0x14] sm:$0x1]
      %v176 = vld [vmem:[%s164 + $0x18] sm:$0xf]
      %v177 = vld [vmem:[%s164 + $0x1c] sm:$0x1]
      %v178 = vld [vmem:[%s164 + $0x20] sm:$0xf]
      %v179 = vld [vmem:[%s164 + $0x24] sm:$0x1]
      %v180 = vld [vmem:[%s164 + $0x28] sm:$0xf]
      %v181 = vld [vmem:[%s164 + $0x2c] sm:$0x1]
      %v182 = vld [vmem:[%s164 + $0x30] sm:$0xf]
      %v183 = vld [vmem:[%s164 + $0x34] sm:$0x1]
      %v184 = vld [vmem:[%s164 + $0x38] sm:$0xf]
      %v185 = vld [vmem:[%s164 + $0x3c] sm:$0x1]
      %v186 = vld [vmem:[%s164 + $0x40] sm:$0xf]
      %v187 = vld [vmem:[%s164 + $0x44] sm:$0x1]
      %v188 = vld [vmem:[%s164 + $0x48] sm:$0xf]
      %v189 = vld [vmem:[%s164 + $0x50] sm:$0xf]
      %v190 = vld [vmem:[%s164 + $0x58] sm:$0xf]
      %v191 = vld [vmem:[%s164 + $0x60] sm:$0xf]
      %v192 = vld [vmem:[%s164 + $0x68] sm:$0xf]
      %v193 = vld [vmem:[%s164 + $0x70] sm:$0xf]
      %v194 = vld [vmem:[%s164 + $0x78] sm:$0xf]
      %v195 = vld [vmem:[%s164 + $0x80] sm:$0xf]
      %v196 = vld [vmem:[%s164 + $0x88] sm:$0xf]
      %v197 = vld [vmem:[%s164 + $0x90] sm:$0xf]
      %v198 = vld [vmem:[%s164 + $0x94] sm:$0x1]
      %v199 = vld [vmem:[%s164 + $0x98] sm:$0xf]
      %v200 = vld [vmem:[%s164 + $0x9c] sm:$0x1]
      %v201 = vld [vmem:[%s164 + $0xa0] sm:$0xf]
      %v202 = vld [vmem:[%s164 + $0xa4] sm:$0x1]
      %v203 = vld [vmem:[%s164 + $0xa8] sm:$0xf]
      %v204 = vld [vmem:[%s164 + $0xac] sm:$0x1]
      %v205 = vld [vmem:[%s164 + $0xb0] sm:$0xf]
      %v206 = vld [vmem:[%s164 + $0xb4] sm:$0x1]
      %v207 = vld [vmem:[%s164 + $0xb8] sm:$0xf]
      %v208 = vld [vmem:[%s164 + $0xbc] sm:$0x1]
      %v209 = vld [vmem:[%s164 + $0xc0] sm:$0xf]
      %v210 = vld [vmem:[%s164 + $0xc4] sm:$0x1]
      %v211 = vld [vmem:[%s164 + $0xc8] sm:$0xf]
      %v212 = vld [vmem:[%s164 + $0xcc] sm:$0x1]
      %v213 = vld [vmem:[%s164 + $0xd8] sm:$0xf]
      %v214 = vld [vmem:[%s164 + $0xe0] sm:$0xf]
      %v215 = vld [vmem:[%s164 + $0xe8] sm:$0xf]
      %v216 = vld [vmem:[%s164 + $0xf0] sm:$0xf]
      %v217 = vld [vmem:[%s164 + $0xf8] sm:$0xf]
      %v218 = vld [vmem:[%s164 + $0x100] sm:$0xf]
      %v219 = vld [vmem:[%s164 + $0x108] sm:$0xf]
      %v220 = vld [vmem:[%s164 + $0x110] sm:$0xf]
      %vm221 = vsmask.f32 3328
      %vm222 = vsmask.f32 7440
      %vm223 = vmor %vm221, %vm222
      %v225 = vshrl.u32 %v170, 16
      %v227 = vrot.slane %v225, 4
      %v228 = vshll.u32 %v170, 16
      %v230 = vrot.slane %v228, 5
      %v231 = vor.u32 %v227, %v230
      %v232 = vrot.slane %v231, 4
      %v234 = vshll.u32 %v171, 16
      %v236 = vrot.slane %v234, 5
      %v237 = vsel %vm223, %v232, %v236
      %v239 = vshrl.u32 %v172, 16
      %v241 = vrot.slane %v239, 4
      %v242 = vshll.u32 %v172, 16
      %v244 = vrot.slane %v242, 5
      %v245 = vor.u32 %v241, %v244
      %v246 = vrot.slane %v245, 4
      %v248 = vshll.u32 %v173, 16
      %v250 = vrot.slane %v248, 5
      %v251 = vsel %vm223, %v246, %v250
      %v253 = vshrl.u32 %v174, 16
      %v255 = vrot.slane %v253, 4
      %v256 = vshll.u32 %v174, 16
      %v258 = vrot.slane %v256, 5
      %v259 = vor.u32 %v255, %v258
      %v260 = vrot.slane %v259, 4
      %v262 = vshll.u32 %v175, 16
      %v264 = vrot.slane %v262, 5
      %v265 = vsel %vm223, %v260, %v264
      %v267 = vshrl.u32 %v176, 16
      %v269 = vrot.slane %v267, 4
      %v270 = vshll.u32 %v176, 16
      %v272 = vrot.slane %v270, 5
      %v273 = vor.u32 %v269, %v272
      %v274 = vrot.slane %v273, 4
      %v276 = vshll.u32 %v177, 16
      %v278 = vrot.slane %v276, 5
      %v279 = vsel %vm223, %v274, %v278
      %v281 = vshrl.u32 %v178, 16
      %v283 = vrot.slane %v281, 4
      %v284 = vshll.u32 %v178, 16
      %v286 = vrot.slane %v284, 5
      %v287 = vor.u32 %v283, %v286
      %v288 = vrot.slane %v287, 4
      %v290 = vshll.u32 %v179, 16
      %v292 = vrot.slane %v290, 5
      %v293 = vsel %vm223, %v288, %v292
      %v295 = vshrl.u32 %v180, 16
      %v297 = vrot.slane %v295, 4
      %v298 = vshll.u32 %v180, 16
      %v300 = vrot.slane %v298, 5
      %v301 = vor.u32 %v297, %v300
      %v302 = vrot.slane %v301, 4
      %v304 = vshll.u32 %v181, 16
      %v306 = vrot.slane %v304, 5
      %v307 = vsel %vm223, %v302, %v306
      %v309 = vshrl.u32 %v182, 16
      %v311 = vrot.slane %v309, 4
      %v312 = vshll.u32 %v182, 16
      %v314 = vrot.slane %v312, 5
      %v315 = vor.u32 %v311, %v314
      %v316 = vrot.slane %v315, 4
      %v318 = vshll.u32 %v183, 16
      %v320 = vrot.slane %v318, 5
      %v321 = vsel %vm223, %v316, %v320
      %v323 = vshrl.u32 %v184, 16
      %v325 = vrot.slane %v323, 4
      %v326 = vshll.u32 %v184, 16
      %v328 = vrot.slane %v326, 5
      %v329 = vor.u32 %v325, %v328
      %v330 = vrot.slane %v329, 4
      %v332 = vshll.u32 %v185, 16
      %v334 = vrot.slane %v332, 5
      %v335 = vsel %vm223, %v330, %v334
      %v337 = vshrl.u32 %v197, 16
      %v339 = vrot.slane %v337, 4
      %v340 = vshll.u32 %v197, 16
      %v342 = vrot.slane %v340, 5
      %v343 = vor.u32 %v339, %v342
      %v344 = vrot.slane %v343, 4
      %v346 = vshll.u32 %v198, 16
      %v348 = vrot.slane %v346, 5
      %v349 = vsel %vm223, %v344, %v348
      %v351 = vshrl.u32 %v199, 16
      %v353 = vrot.slane %v351, 4
      %v354 = vshll.u32 %v199, 16
      %v356 = vrot.slane %v354, 5
      %v357 = vor.u32 %v353, %v356
      %v358 = vrot.slane %v357, 4
      %v360 = vshll.u32 %v200, 16
      %v362 = vrot.slane %v360, 5
      %v363 = vsel %vm223, %v358, %v362
      %v365 = vshrl.u32 %v201, 16
      %v367 = vrot.slane %v365, 4
      %v368 = vshll.u32 %v201, 16
      %v370 = vrot.slane %v368, 5
      %v371 = vor.u32 %v367, %v370
      %v372 = vrot.slane %v371, 4
      %v374 = vshll.u32 %v202, 16
      %v376 = vrot.slane %v374, 5
      %v377 = vsel %vm223, %v372, %v376
      %v379 = vshrl.u32 %v203, 16
      %v381 = vrot.slane %v379, 4
      %v382 = vshll.u32 %v203, 16
      %v384 = vrot.slane %v382, 5
      %v385 = vor.u32 %v381, %v384
      %v386 = vrot.slane %v385, 4
      %v388 = vshll.u32 %v204, 16
      %v390 = vrot.slane %v388, 5
      %v391 = vsel %vm223, %v386, %v390
      %v393 = vshrl.u32 %v205, 16
      %v395 = vrot.slane %v393, 4
      %v396 = vshll.u32 %v205, 16
      %v398 = vrot.slane %v396, 5
      %v399 = vor.u32 %v395, %v398
      %v400 = vrot.slane %v399, 4
      %v402 = vshll.u32 %v206, 16
      %v404 = vrot.slane %v402, 5
      %v405 = vsel %vm223, %v400, %v404
      %v407 = vshrl.u32 %v207, 16
      %v409 = vrot.slane %v407, 4
      %v410 = vshll.u32 %v207, 16
      %v412 = vrot.slane %v410, 5
      %v413 = vor.u32 %v409, %v412
      %v414 = vrot.slane %v413, 4
      %v416 = vshll.u32 %v208, 16
      %v418 = vrot.slane %v416, 5
      %v419 = vsel %vm223, %v414, %v418
      %v421 = vshrl.u32 %v209, 16
      %v423 = vrot.slane %v421, 4
      %v424 = vshll.u32 %v209, 16
      %v426 = vrot.slane %v424, 5
      %v427 = vor.u32 %v423, %v426
      %v428 = vrot.slane %v427, 4
      %v430 = vshll.u32 %v210, 16
      %v432 = vrot.slane %v430, 5
      %v433 = vsel %vm223, %v428, %v432
      %v435 = vshrl.u32 %v211, 16
      %v437 = vrot.slane %v435, 4
      %v438 = vshll.u32 %v211, 16
      %v440 = vrot.slane %v438, 5
      %v441 = vor.u32 %v437, %v440
      %v442 = vrot.slane %v441, 4
      %v444 = vshll.u32 %v212, 16
      %v446 = vrot.slane %v444, 5
      %v447 = vsel %vm223, %v442, %v446
      %v449 = vshrl.u32 %v186, 16
      %v451 = vrot.slane %v449, 4
      %v452 = vshll.u32 %v186, 16
      %v454 = vrot.slane %v452, 5
      %v455 = vor.u32 %v451, %v454
      %v456 = vrot.slane %v455, 4
      %v458 = vshll.u32 %v187, 16
      %v460 = vrot.slane %v458, 5
      %v461 = vsel %vm223, %v456, %v460
      %v470 = vunpack.c.l.b16 %v170
      %v471 = vunpack.c.l.b16 %v172
      %v472 = vunpack.c.l.b16 %v174
      %v473 = vunpack.c.l.b16 %v176
      %v474 = vunpack.c.l.b16 %v178
      %v475 = vunpack.c.l.b16 %v180
      %v476 = vunpack.c.l.b16 %v182
      %v477 = vunpack.c.l.b16 %v184
      %v478 = vpack.c.b16 %v471, %v470
      %v479 = vpack.c.b16 %v473, %v472
      %v480 = vpack.c.b16 %v475, %v474
      %v481 = vpack.c.b16 %v477, %v476
      %v490 = vunpack.c.l.b16 %v188
      %v491 = vunpack.c.l.b16 %v189
      %v492 = vunpack.c.l.b16 %v190
      %v493 = vunpack.c.l.b16 %v191
      %v494 = vunpack.c.l.b16 %v192
      %v495 = vunpack.c.l.b16 %v193
      %v496 = vunpack.c.l.b16 %v194
      %v497 = vunpack.c.l.b16 %v195
      %v498 = vpack.c.b16 %v491, %v490
      %v499 = vpack.c.b16 %v493, %v492
      %v500 = vpack.c.b16 %v495, %v494
      %v501 = vpack.c.b16 %v497, %v496
      %502 = vrot.lane.b32.xlu0 %v498, 4
      %v503 = vpop.permute.xlu0 %502
      %504 = vrot.lane.b32.xlu0 %v499, 4
      %v505 = vpop.permute.xlu0 %504
      %506 = vrot.lane.b32.xlu0 %v500, 4
      %v507 = vpop.permute.xlu0 %506
      %508 = vrot.lane.b32.xlu0 %v501, 4
      %v509 = vpop.permute.xlu0 %508
      %v510 = vunpack.c.l.b16 %v237
      %v511 = vunpack.c.l.b16 %v251
      %v512 = vunpack.c.l.b16 %v265
      %v513 = vunpack.c.l.b16 %v279
      %v514 = vunpack.c.l.b16 %v293
      %v515 = vunpack.c.l.b16 %v307
      %v516 = vunpack.c.l.b16 %v321
      %v517 = vunpack.c.l.b16 %v335
      %v518 = vpack.c.b16 %v511, %v510
      %v519 = vpack.c.b16 %v513, %v512
      %v520 = vpack.c.b16 %v515, %v514
      %v521 = vpack.c.b16 %v517, %v516
      %522 = vrot.lane.b32.xlu0 %v518, 8
      %v523 = vpop.permute.xlu0 %522
      %524 = vrot.lane.b32.xlu0 %v519, 8
      %v525 = vpop.permute.xlu0 %524
      %526 = vrot.lane.b32.xlu0 %v520, 8
      %v527 = vpop.permute.xlu0 %526
      %528 = vrot.lane.b32.xlu0 %v521, 8
      %v529 = vpop.permute.xlu0 %528
      %v538 = vunpack.c.l.b16 %v197
      %v539 = vunpack.c.l.b16 %v199
      %v540 = vunpack.c.l.b16 %v201
      %v541 = vunpack.c.l.b16 %v203
      %v542 = vunpack.c.l.b16 %v205
      %v543 = vunpack.c.l.b16 %v207
      %v544 = vunpack.c.l.b16 %v209
      %v545 = vunpack.c.l.b16 %v211
      %v546 = vpack.c.b16 %v539, %v538
      %v547 = vpack.c.b16 %v541, %v540
      %v548 = vpack.c.b16 %v543, %v542
      %v549 = vpack.c.b16 %v545, %v544
      %550 = vrot.lane.b32.xlu0 %v546, 12
      %v551 = vpop.permute.xlu0 %550
      %552 = vrot.lane.b32.xlu0 %v547, 12
      %v553 = vpop.permute.xlu0 %552
      %554 = vrot.lane.b32.xlu0 %v548, 12
      %v555 = vpop.permute.xlu0 %554
      %556 = vrot.lane.b32.xlu0 %v549, 12
      %v557 = vpop.permute.xlu0 %556
      %v566 = vunpack.c.l.b16 %v213
      %v567 = vunpack.c.l.b16 %v214
      %v568 = vunpack.c.l.b16 %v215
      %v569 = vunpack.c.l.b16 %v216
      %v570 = vunpack.c.l.b16 %v217
      %v571 = vunpack.c.l.b16 %v218
      %v572 = vunpack.c.l.b16 %v219
      %v573 = vunpack.c.l.b16 %v220
      %v574 = vpack.c.b16 %v567, %v566
      %v575 = vpack.c.b16 %v569, %v568
      %v576 = vpack.c.b16 %v571, %v570
      %v577 = vpack.c.b16 %v573, %v572
      %578 = vrot.lane.b32.xlu0 %v574, 16
      %v579 = vpop.permute.xlu0 %578
      %580 = vrot.lane.b32.xlu0 %v575, 16
      %v581 = vpop.permute.xlu0 %580
      %582 = vrot.lane.b32.xlu0 %v576, 16
      %v583 = vpop.permute.xlu0 %582
      %584 = vrot.lane.b32.xlu0 %v577, 16
      %v585 = vpop.permute.xlu0 %584
      %v586 = vunpack.c.l.b16 %v349
      %v587 = vunpack.c.l.b16 %v363
      %v588 = vunpack.c.l.b16 %v377
      %v589 = vunpack.c.l.b16 %v391
      %v590 = vunpack.c.l.b16 %v405
      %v591 = vunpack.c.l.b16 %v419
      %v592 = vunpack.c.l.b16 %v433
      %v593 = vunpack.c.l.b16 %v447
      %v594 = vpack.c.b16 %v587, %v586
      %v595 = vpack.c.b16 %v589, %v588
      %v596 = vpack.c.b16 %v591, %v590
      %v597 = vpack.c.b16 %v593, %v592
      %598 = vrot.lane.b32.xlu0 %v594, 20
      %v599 = vpop.permute.xlu0 %598
      %600 = vrot.lane.b32.xlu0 %v595, 20
      %v601 = vpop.permute.xlu0 %600
      %602 = vrot.lane.b32.xlu0 %v596, 20
      %v603 = vpop.permute.xlu0 %602
      %604 = vrot.lane.b32.xlu0 %v597, 20
      %v605 = vpop.permute.xlu0 %604
      %v607 = vunpack.c.l.b16 %v186
      %v608 = vpack.c.b16 %v472, %v471
      %v609 = vpack.c.b16 %v474, %v473
      %v610 = vpack.c.b16 %v476, %v475
      %v611 = vpack.c.b16 %v607, %v477
      %612 = vrot.lane.b32.xlu0 %v608, 24
      %v613 = vpop.permute.xlu0 %612
      %614 = vrot.lane.b32.xlu0 %v609, 24
      %v615 = vpop.permute.xlu0 %614
      %616 = vrot.lane.b32.xlu0 %v610, 24
      %v617 = vpop.permute.xlu0 %616
      %618 = vrot.lane.b32.xlu0 %v611, 24
      %v619 = vpop.permute.xlu0 %618
      %v621 = vunpack.c.l.b16 %v196
      %v622 = vpack.c.b16 %v492, %v491
      %v623 = vpack.c.b16 %v494, %v493
      %v624 = vpack.c.b16 %v496, %v495
      %v625 = vpack.c.b16 %v621, %v497
      %626 = vrot.lane.b32.xlu0 %v622, 28
      %v627 = vpop.permute.xlu0 %626
      %628 = vrot.lane.b32.xlu0 %v623, 28
      %v629 = vpop.permute.xlu0 %628
      %630 = vrot.lane.b32.xlu0 %v624, 28
      %v631 = vpop.permute.xlu0 %630
      %632 = vrot.lane.b32.xlu0 %v625, 28
      %v633 = vpop.permute.xlu0 %632
      %v634 = vunpack.c.l.b16 %v461
      %v635 = vpack.c.b16 %v512, %v511
      %v636 = vpack.c.b16 %v514, %v513
      %v637 = vpack.c.b16 %v516, %v515
      %v638 = vpack.c.b16 %v634, %v517
      %639 = vrot.lane.b32.xlu0 %v635, 32
      %v640 = vpop.permute.xlu0 %639
      %641 = vrot.lane.b32.xlu0 %v636, 32
      %v642 = vpop.permute.xlu0 %641
      %643 = vrot.lane.b32.xlu0 %v637, 32
      %v644 = vpop.permute.xlu0 %643
      %645 = vrot.lane.b32.xlu0 %v638, 32
      %v646 = vpop.permute.xlu0 %645
      %vm647 = vcmask 31744
      %v650 = vsel %vm647, %v478, %v503
      %v653 = vsel %vm647, %v479, %v505
      %v656 = vsel %vm647, %v480, %v507
      %v659 = vsel %vm647, %v481, %v509
      %vm660 = vcmask 64512
      %v662 = vsel %vm660, %v650, %v523
      %v664 = vsel %vm660, %v653, %v525
      %v666 = vsel %vm660, %v656, %v527
      %v668 = vsel %vm660, %v659, %v529
      %vm669 = vcmask 97280
      %v671 = vsel %vm669, %v662, %v551
      %v673 = vsel %vm669, %v664, %v553
      %v675 = vsel %vm669, %v666, %v555
      %v677 = vsel %vm669, %v668, %v557
      %vm678 = vcmask 130048
      %v680 = vsel %vm678, %v671, %v579
      %v682 = vsel %vm678, %v673, %v581
      %v684 = vsel %vm678, %v675, %v583
      %v686 = vsel %vm678, %v677, %v585
      %vm687 = vcmask 162816
      %v689 = vsel %vm687, %v680, %v599
      %v691 = vsel %vm687, %v682, %v601
      %v693 = vsel %vm687, %v684, %v603
      %v695 = vsel %vm687, %v686, %v605
      %vm696 = vcmask 195584
      %v698 = vsel %vm696, %v689, %v613
      %v700 = vsel %vm696, %v691, %v615
      %v702 = vsel %vm696, %v693, %v617
      %v704 = vsel %vm696, %v695, %v619
      %vm705 = vcmask 228352
      %v707 = vsel %vm705, %v698, %v627
      %v709 = vsel %vm705, %v700, %v629
      %v711 = vsel %vm705, %v702, %v631
      %v713 = vsel %vm705, %v704, %v633
      %vm714 = vcmask 261120
      %v716 = vsel %vm714, %v707, %v640
      %v718 = vsel %vm714, %v709, %v642
      %v720 = vsel %vm714, %v711, %v644
      %v722 = vsel %vm714, %v713, %v646
      %v723 = vld [vmem:[%s1] sm:$0xf]
      %v724 = vld [vmem:[%s1 + $0x4] sm:$0xf]
      %v725 = vld [vmem:[%s1 + $0x8] sm:$0xf]
      %v726 = vld [vmem:[%s1 + $0xc] sm:$0xf]
      %v727 = vld [vmem:[%s1 + $0x10] sm:$0x3]
      %v733 = vunpack.c.l.b16 %v723
      %v734 = vunpack.c.l.b16 %v724
      %v735 = vunpack.c.l.b16 %v725
      %v736 = vunpack.c.l.b16 %v726
      %v737 = vunpack.c.l.b16 %v727
      %v738 = vpack.c.b16 %v734, %v733
      %v739 = vpack.c.b16 %v736, %v735
      %v740 = vpack.c.b16 %v737, %v737
      %vm743 = vcmask 293888
      %v744 = vsel %vm743, %v716, 0
      %v746 = vsel %vm743, %v718, 0
      %v748 = vsel %vm743, %v720, 0
      %v750 = vsel %vm743, %v722, 0
      %vm752 = vcmask 1041408
      %v754 = vsel %vm752, %v740, 0
      %756 = vmatpush.bf16.msra.mxu0 0
      %757 = vmatpush.bf16.msra.mxu0 0
      %758 = vmatpush.bf16.msra.mxu0 0
      %759 = vmatpush.bf16.msra.mxu0 0
      %760 = vmatpush.bf16.msra.mxu0 0
      %761 = vmatpush.bf16.msra.mxu0 %v754
      %762 = vmatpush.bf16.msra.mxu0 %v739
      %763 = vmatpush.bf16.msra.mxu0 %v738
      %764 = vmatmul.bf16.gmra.mxu0 %v744
      %v765 = vpop.f32.mrf.mxu0
      %v766 = vadd.f32 0.0, %v765
      %v767 = vpop.f32.mrf.mxu0
      %v768 = vadd.f32 0.0, %v767
      %769 = vmatmul.bf16.gmra.mxu0 %v746
      %v770 = vpop.f32.mrf.mxu0
      %v771 = vadd.f32 0.0, %v770
      %v772 = vpop.f32.mrf.mxu0
      %v773 = vadd.f32 0.0, %v772
      %774 = vmatmul.bf16.gmra.mxu0 %v748
      %v775 = vpop.f32.mrf.mxu0
      %v776 = vadd.f32 0.0, %v775
      %v777 = vpop.f32.mrf.mxu0
      %v778 = vadd.f32 0.0, %v777
      %779 = vmatmul.bf16.gmra.mxu0 %v750
      %v780 = vpop.f32.mrf.mxu0
      %v781 = vadd.f32 0.0, %v780
      %v782 = vpop.f32.mrf.mxu0
      %v783 = vadd.f32 0.0, %v782
      %784 = vdwg.mxu0
      %v785 = vand.u32 2147483647, %v766
      %v786 = vand.u32 2147483647, %v768
      %v787 = vand.u32 2147483647, %v771
      %v788 = vand.u32 2147483647, %v773
      %v789 = vand.u32 2147483647, %v776
      %v790 = vand.u32 2147483647, %v778
      %v791 = vand.u32 2147483647, %v781
      %v792 = vand.u32 2147483647, %v783
      %v793 = vsub.f32 0.0, %v785
      %v794 = vsub.f32 0.0, %v786
      %v795 = vsub.f32 0.0, %v787
      %v796 = vsub.f32 0.0, %v788
      %v797 = vsub.f32 0.0, %v789
      %v798 = vsub.f32 0.0, %v790
      %v799 = vsub.f32 0.0, %v791
      %v800 = vsub.f32 0.0, %v792
      %v801 = vmul.f32 %v793, 1.442695
      %v802 = vpow.pop %v801
      %v803 = vmul.f32 %v794, 1.442695
      %v804 = vpow.pop %v803
      %v805 = vmul.f32 %v795, 1.442695
      %v806 = vpow.pop %v805
      %v807 = vmul.f32 %v796, 1.442695
      %v808 = vpow.pop %v807
      %v809 = vmul.f32 %v797, 1.442695
      %v810 = vpow.pop %v809
      %v811 = vmul.f32 %v798, 1.442695
      %v812 = vpow.pop %v811
      %v813 = vmul.f32 %v799, 1.442695
      %v814 = vpow.pop %v813
      %v815 = vmul.f32 %v800, 1.442695
      %v816 = vpow.pop %v815
      %v817 = vadd.f32 %v802, 1.0
      %v818 = vadd.f32 %v804, 1.0
      %v819 = vadd.f32 %v806, 1.0
      %v820 = vadd.f32 %v808, 1.0
      %v821 = vadd.f32 %v810, 1.0
      %v822 = vadd.f32 %v812, 1.0
      %v823 = vadd.f32 %v814, 1.0
      %v824 = vadd.f32 %v816, 1.0
      %v825 = vrcp.pop %v817
      %v826 = vrcp.pop %v818
      %v827 = vrcp.pop %v819
      %v828 = vrcp.pop %v820
      %v829 = vrcp.pop %v821
      %v830 = vrcp.pop %v822
      %v831 = vrcp.pop %v823
      %v832 = vrcp.pop %v824
      %vm833 = vcmp.ge.f32.partialorder %v766, 0.0
      %vm834 = vcmp.ge.f32.partialorder %v768, 0.0
      %vm835 = vcmp.ge.f32.partialorder %v771, 0.0
      %vm836 = vcmp.ge.f32.partialorder %v773, 0.0
      %vm837 = vcmp.ge.f32.partialorder %v776, 0.0
      %vm838 = vcmp.ge.f32.partialorder %v778, 0.0
      %vm839 = vcmp.ge.f32.partialorder %v781, 0.0
      %vm840 = vcmp.ge.f32.partialorder %v783, 0.0
      %v841 = vsel %vm833, 1.0, %v802
      %v842 = vsel %vm834, 1.0, %v804
      %v843 = vsel %vm835, 1.0, %v806
      %v844 = vsel %vm836, 1.0, %v808
      %v845 = vsel %vm837, 1.0, %v810
      %v846 = vsel %vm838, 1.0, %v812
      %v847 = vsel %vm839, 1.0, %v814
      %v848 = vsel %vm840, 1.0, %v816
      %v849 = vmul.f32 %v841, %v825
      %v850 = vmul.f32 %v842, %v826
      %v851 = vmul.f32 %v843, %v827
      %v852 = vmul.f32 %v844, %v828
      %v853 = vmul.f32 %v845, %v829
      %v854 = vmul.f32 %v846, %v830
      %v855 = vmul.f32 %v847, %v831
      %v856 = vmul.f32 %v848, %v832
      %v857 = vsub.f32 %v802, 1.0
      %v858 = vsub.f32 %v804, 1.0
      %v859 = vsub.f32 %v806, 1.0
      %v860 = vsub.f32 %v808, 1.0
      %v861 = vsub.f32 %v810, 1.0
      %v862 = vsub.f32 %v812, 1.0
      %v863 = vsub.f32 %v814, 1.0
      %v864 = vsub.f32 %v816, 1.0
      %v865 = vsel %vm833, %v766, %v857
      %v866 = vsel %vm834, %v768, %v858
      %v867 = vsel %vm835, %v771, %v859
      %v868 = vsel %vm836, %v773, %v860
      %v869 = vsel %vm837, %v776, %v861
      %v870 = vsel %vm838, %v778, %v862
      %v871 = vsel %vm839, %v781, %v863
      %v872 = vsel %vm840, %v783, %v864
      %v873 = vmul.f32 %v865, %v849
      %v874 = vmul.f32 %v866, %v850
      %v875 = vmul.f32 %v867, %v851
      %v876 = vmul.f32 %v868, %v852
      %v877 = vmul.f32 %v869, %v853
      %v878 = vmul.f32 %v870, %v854
      %v879 = vmul.f32 %v871, %v855
      %v880 = vmul.f32 %v872, %v856
      %v881 = vpack.c.bf16 %v873, %v873
      %v882 = vpack.c.bf16 %v874, %v874
      %v883 = vpack.c.bf16 %v875, %v875
      %v884 = vpack.c.bf16 %v876, %v876
      %v885 = vpack.c.bf16 %v877, %v877
      %v886 = vpack.c.bf16 %v878, %v878
      %v887 = vpack.c.bf16 %v879, %v879
      %v888 = vpack.c.bf16 %v880, %v880
      %v890 = vshrl.u32 0, 16
      %v892 = vrot.slane %v890, 7
      %v893 = vshll.u32 0, 16
      %v895 = vor.u32 %v892, %v893
      %v897 = vshrl.u32 %v881, 16
      %v899 = vrot.slane %v897, 7
      %v900 = vshll.u32 %v881, 16
      %v902 = vor.u32 %v899, %v900
      %v904 = vshrl.u32 %v882, 16
      %v906 = vrot.slane %v904, 7
      %v907 = vshll.u32 %v882, 16
      %v909 = vor.u32 %v906, %v907
      %v911 = vshrl.u32 %v883, 16
      %v913 = vrot.slane %v911, 7
      %v914 = vshll.u32 %v883, 16
      %v916 = vor.u32 %v913, %v914
      %v918 = vshrl.u32 %v884, 16
      %v920 = vrot.slane %v918, 7
      %v921 = vshll.u32 %v884, 16
      %v923 = vor.u32 %v920, %v921
      %v925 = vshrl.u32 %v885, 16
      %v927 = vrot.slane %v925, 7
      %v928 = vshll.u32 %v885, 16
      %v930 = vor.u32 %v927, %v928
      %v932 = vshrl.u32 %v886, 16
      %v934 = vrot.slane %v932, 7
      %v935 = vshll.u32 %v886, 16
      %v937 = vor.u32 %v934, %v935
      %v939 = vshrl.u32 %v887, 16
      %v941 = vrot.slane %v939, 7
      %v942 = vshll.u32 %v887, 16
      %v944 = vor.u32 %v941, %v942
      %v946 = vshrl.u32 %v888, 16
      %v948 = vrot.slane %v946, 7
      %v949 = vshll.u32 %v888, 16
      %v951 = vor.u32 %v948, %v949
      %vm961 = vcmask 1040384
      %vm962 = vsmask.f32 256
      %vm963 = vmand %vm961, %vm962
      %v964 = vsel %vm963, 0, %v895
      %v965 = vsel %vm963, 0, %v902
      %v966 = vsel %vm963, 0, %v909
      %v967 = vsel %vm963, 0, %v916
      %v968 = vsel %vm963, 0, %v923
      %v969 = vsel %vm963, 0, %v930
      %v970 = vsel %vm963, 0, %v937
      %v971 = vsel %vm963, 0, %v944
      %v972 = vsel %vm963, 0, %v951
      %vm973 = vcmask 1044480
      %vm974 = vsmask.f32 4352
      %vm975 = vmand %vm973, %vm974
      %v976 = vsel %vm975, %v964, 0
      %v977 = vsel %vm975, %v965, 0
      %v978 = vsel %vm975, %v966, 0
      %v979 = vsel %vm975, %v967, 0
      %v980 = vsel %vm975, %v968, 0
      %v981 = vsel %vm975, %v969, 0
      %v982 = vsel %vm975, %v970, 0
      %v983 = vsel %vm975, %v971, 0
      %v984 = vsel %vm975, %v972, 0
      %v993 = vunpack.c.l.b16 %v976
      %v994 = vunpack.c.h.b16 %v976
      %v995 = vunpack.c.l.b16 %v977
      %v996 = vunpack.c.h.b16 %v977
      %v997 = vunpack.c.l.b16 %v978
      %v998 = vunpack.c.h.b16 %v978
      %v999 = vunpack.c.l.b16 %v979
      %v1000 = vunpack.c.h.b16 %v979
      %v1001 = vunpack.c.l.b16 %v980
      %v1002 = vunpack.c.h.b16 %v980
      %v1003 = vunpack.c.l.b16 %v981
      %v1004 = vunpack.c.h.b16 %v981
      %v1005 = vunpack.c.l.b16 %v982
      %v1006 = vunpack.c.h.b16 %v982
      %v1007 = vunpack.c.l.b16 %v983
      %v1008 = vunpack.c.h.b16 %v983
      %v1009 = vpack.c.b16 %v993, %v993
      %v1010 = vpack.c.b16 %v994, %v994
      %v1011 = vpack.c.b16 %v995, %v995
      %v1012 = vpack.c.b16 %v996, %v996
      %v1013 = vpack.c.b16 %v997, %v997
      %v1014 = vpack.c.b16 %v998, %v998
      %v1015 = vpack.c.b16 %v999, %v999
      %v1016 = vpack.c.b16 %v1000, %v1000
      %v1017 = vpack.c.b16 %v1001, %v1001
      %v1018 = vpack.c.b16 %v1002, %v1002
      %v1019 = vpack.c.b16 %v1003, %v1003
      %v1020 = vpack.c.b16 %v1004, %v1004
      %v1021 = vpack.c.b16 %v1005, %v1005
      %v1022 = vpack.c.b16 %v1006, %v1006
      %v1023 = vpack.c.b16 %v1007, %v1007
      %v1024 = vpack.c.b16 %v1008, %v1008
      %v1026 = vshrl.u32 %v1009, 16
      %v1028 = vrot.slane %v1026, 4
      %v1029 = vshll.u32 %v1009, 16
      %v1031 = vrot.slane %v1029, 5
      %v1032 = vor.u32 %v1028, %v1031
      %v1033 = vrot.slane %v1032, 4
      %v1035 = vshll.u32 %v1010, 16
      %v1037 = vrot.slane %v1035, 5
      %v1038 = vsel %vm223, %v1033, %v1037
      %v1040 = vshrl.u32 %v1011, 16
      %v1042 = vrot.slane %v1040, 4
      %v1043 = vshll.u32 %v1011, 16
      %v1045 = vrot.slane %v1043, 5
      %v1046 = vor.u32 %v1042, %v1045
      %v1047 = vrot.slane %v1046, 4
      %v1049 = vshll.u32 %v1012, 16
      %v1051 = vrot.slane %v1049, 5
      %v1052 = vsel %vm223, %v1047, %v1051
      %v1054 = vshrl.u32 %v1013, 16
      %v1056 = vrot.slane %v1054, 4
      %v1057 = vshll.u32 %v1013, 16
      %v1059 = vrot.slane %v1057, 5
      %v1060 = vor.u32 %v1056, %v1059
      %v1061 = vrot.slane %v1060, 4
      %v1063 = vshll.u32 %v1014, 16
      %v1065 = vrot.slane %v1063, 5
      %v1066 = vsel %vm223, %v1061, %v1065
      %v1068 = vshrl.u32 %v1015, 16
      %v1070 = vrot.slane %v1068, 4
      %v1071 = vshll.u32 %v1015, 16
      %v1073 = vrot.slane %v1071, 5
      %v1074 = vor.u32 %v1070, %v1073
      %v1075 = vrot.slane %v1074, 4
      %v1077 = vshll.u32 %v1016, 16
      %v1079 = vrot.slane %v1077, 5
      %v1080 = vsel %vm223, %v1075, %v1079
      %v1082 = vshrl.u32 %v1017, 16
      %v1084 = vrot.slane %v1082, 4
      %v1085 = vshll.u32 %v1017, 16
      %v1087 = vrot.slane %v1085, 5
      %v1088 = vor.u32 %v1084, %v1087
      %v1089 = vrot.slane %v1088, 4
      %v1091 = vshll.u32 %v1018, 16
      %v1093 = vrot.slane %v1091, 5
      %v1094 = vsel %vm223, %v1089, %v1093
      %v1096 = vshrl.u32 %v1019, 16
      %v1098 = vrot.slane %v1096, 4
      %v1099 = vshll.u32 %v1019, 16
      %v1101 = vrot.slane %v1099, 5
      %v1102 = vor.u32 %v1098, %v1101
      %v1103 = vrot.slane %v1102, 4
      %v1105 = vshll.u32 %v1020, 16
      %v1107 = vrot.slane %v1105, 5
      %v1108 = vsel %vm223, %v1103, %v1107
      %v1110 = vshrl.u32 %v1021, 16
      %v1112 = vrot.slane %v1110, 4
      %v1113 = vshll.u32 %v1021, 16
      %v1115 = vrot.slane %v1113, 5
      %v1116 = vor.u32 %v1112, %v1115
      %v1117 = vrot.slane %v1116, 4
      %v1119 = vshll.u32 %v1022, 16
      %v1121 = vrot.slane %v1119, 5
      %v1122 = vsel %vm223, %v1117, %v1121
      %v1124 = vshrl.u32 %v1023, 16
      %v1126 = vrot.slane %v1124, 4
      %v1127 = vshll.u32 %v1023, 16
      %v1129 = vrot.slane %v1127, 5
      %v1130 = vor.u32 %v1126, %v1129
      %v1131 = vrot.slane %v1130, 4
      %v1133 = vshll.u32 %v1024, 16
      %v1135 = vrot.slane %v1133, 5
      %v1136 = vsel %vm223, %v1131, %v1135
      %vm1137 = vcmask 1042432
      %vm1138 = vcmask 1046532
      %vm1139 = vmor %vm1137, %vm1138
      %v1140 = vrot.slane %v1009, 5
      %v1141 = vrot.slane %v1140, 4
      %v1142 = vrot.slane %v1010, 5
      %v1143 = vsel %vm1139, %v1141, %v1142
      %v1144 = vrot.slane %v1011, 5
      %v1145 = vrot.slane %v1144, 4
      %v1146 = vrot.slane %v1012, 5
      %v1147 = vsel %vm1139, %v1145, %v1146
      %v1148 = vrot.slane %v1013, 5
      %v1149 = vrot.slane %v1148, 4
      %v1150 = vrot.slane %v1014, 5
      %v1151 = vsel %vm1139, %v1149, %v1150
      %v1152 = vrot.slane %v1015, 5
      %v1153 = vrot.slane %v1152, 4
      %v1154 = vrot.slane %v1016, 5
      %v1155 = vsel %vm1139, %v1153, %v1154
      %v1156 = vrot.slane %v1017, 5
      %v1157 = vrot.slane %v1156, 4
      %v1158 = vrot.slane %v1018, 5
      %v1159 = vsel %vm1139, %v1157, %v1158
      %v1160 = vrot.slane %v1019, 5
      %v1161 = vrot.slane %v1160, 4
      %v1162 = vrot.slane %v1020, 5
      %v1163 = vsel %vm1139, %v1161, %v1162
      %v1164 = vrot.slane %v1021, 5
      %v1165 = vrot.slane %v1164, 4
      %v1166 = vrot.slane %v1022, 5
      %v1167 = vsel %vm1139, %v1165, %v1166
      %v1168 = vrot.slane %v1023, 5
      %v1169 = vrot.slane %v1168, 4
      %v1170 = vrot.slane %v1024, 5
      %v1171 = vsel %vm1139, %v1169, %v1170
      %v1173 = vunpack.c.l.b16 %v984
      %v1174 = vunpack.c.h.b16 %v984
      %v1175 = vpack.c.b16 %v1173, %v1173
      %v1176 = vpack.c.b16 %v1174, %v1174
      %v1178 = vshrl.u32 %v1175, 16
      %v1180 = vrot.slane %v1178, 4
      %v1181 = vshll.u32 %v1175, 16
      %v1183 = vrot.slane %v1181, 5
      %v1184 = vor.u32 %v1180, %v1183
      %v1185 = vrot.slane %v1184, 4
      %v1187 = vshll.u32 %v1176, 16
      %v1189 = vrot.slane %v1187, 5
      %v1190 = vsel %vm223, %v1185, %v1189
      %v1191 = vrot.slane %v1175, 5
      %v1192 = vrot.slane %v1191, 4
      %v1193 = vrot.slane %v1176, 5
      %v1194 = vsel %vm1139, %v1192, %v1193
      %v1195 = vpack.c.b16 %v995, %v993
      %v1196 = vpack.c.b16 %v999, %v997
      %v1197 = vpack.c.b16 %v1003, %v1001
      %v1198 = vpack.c.b16 %v1007, %v1005
      %v1199 = vunpack.c.l.b16 %v1038
      %v1200 = vunpack.c.l.b16 %v1052
      %v1201 = vunpack.c.l.b16 %v1066
      %v1202 = vunpack.c.l.b16 %v1080
      %v1203 = vunpack.c.l.b16 %v1094
      %v1204 = vunpack.c.l.b16 %v1108
      %v1205 = vunpack.c.l.b16 %v1122
      %v1206 = vunpack.c.l.b16 %v1136
      %v1207 = vpack.c.b16 %v1200, %v1199
      %v1208 = vpack.c.b16 %v1202, %v1201
      %v1209 = vpack.c.b16 %v1204, %v1203
      %v1210 = vpack.c.b16 %v1206, %v1205
      %1211 = vrot.lane.b32.xlu0 %v1207, 8
      %v1212 = vpop.permute.xlu0 %1211
      %1213 = vrot.lane.b32.xlu0 %v1208, 8
      %v1214 = vpop.permute.xlu0 %1213
      %1215 = vrot.lane.b32.xlu0 %v1209, 8
      %v1216 = vpop.permute.xlu0 %1215
      %1217 = vrot.lane.b32.xlu0 %v1210, 8
      %v1218 = vpop.permute.xlu0 %1217
      %v1219 = vunpack.c.l.b16 %v1143
      %v1220 = vunpack.c.l.b16 %v1147
      %v1221 = vunpack.c.l.b16 %v1151
      %v1222 = vunpack.c.l.b16 %v1155
      %v1223 = vunpack.c.l.b16 %v1159
      %v1224 = vunpack.c.l.b16 %v1163
      %v1225 = vunpack.c.l.b16 %v1167
      %v1226 = vunpack.c.l.b16 %v1171
      %v1227 = vpack.c.b16 %v1220, %v1219
      %v1228 = vpack.c.b16 %v1222, %v1221
      %v1229 = vpack.c.b16 %v1224, %v1223
      %v1230 = vpack.c.b16 %v1226, %v1225
      %1231 = vrot.lane.b32.xlu0 %v1227, 16
      %v1232 = vpop.permute.xlu0 %1231
      %1233 = vrot.lane.b32.xlu0 %v1228, 16
      %v1234 = vpop.permute.xlu0 %1233
      %1235 = vrot.lane.b32.xlu0 %v1229, 16
      %v1236 = vpop.permute.xlu0 %1235
      %1237 = vrot.lane.b32.xlu0 %v1230, 16
      %v1238 = vpop.permute.xlu0 %1237
      %v1239 = vpack.c.b16 %v997, %v995
      %v1240 = vpack.c.b16 %v1001, %v999
      %v1241 = vpack.c.b16 %v1005, %v1003
      %v1242 = vpack.c.b16 %v1173, %v1007
      %1243 = vrot.lane.b32.xlu0 %v1239, 24
      %v1244 = vpop.permute.xlu0 %1243
      %1245 = vrot.lane.b32.xlu0 %v1240, 24
      %v1246 = vpop.permute.xlu0 %1245
      %1247 = vrot.lane.b32.xlu0 %v1241, 24
      %v1248 = vpop.permute.xlu0 %1247
      %1249 = vrot.lane.b32.xlu0 %v1242, 24
      %v1250 = vpop.permute.xlu0 %1249
      %v1251 = vunpack.c.l.b16 %v1190
      %v1252 = vpack.c.b16 %v1201, %v1200
      %v1253 = vpack.c.b16 %v1203, %v1202
      %v1254 = vpack.c.b16 %v1205, %v1204
      %v1255 = vpack.c.b16 %v1251, %v1206
      %1256 = vrot.lane.b32.xlu0 %v1252, 32
      %v1257 = vpop.permute.xlu0 %1256
      %1258 = vrot.lane.b32.xlu0 %v1253, 32
      %v1259 = vpop.permute.xlu0 %1258
      %1260 = vrot.lane.b32.xlu0 %v1254, 32
      %v1261 = vpop.permute.xlu0 %1260
      %1262 = vrot.lane.b32.xlu0 %v1255, 32
      %v1263 = vpop.permute.xlu0 %1262
      %v1264 = vunpack.c.l.b16 %v1194
      %v1265 = vpack.c.b16 %v1221, %v1220
      %v1266 = vpack.c.b16 %v1223, %v1222
      %v1267 = vpack.c.b16 %v1225, %v1224
      %v1268 = vpack.c.b16 %v1264, %v1226
      %1269 = vrot.lane.b32.xlu0 %v1265, 40
      %v1270 = vpop.permute.xlu0 %1269
      %1271 = vrot.lane.b32.xlu0 %v1266, 40
      %v1272 = vpop.permute.xlu0 %1271
      %1273 = vrot.lane.b32.xlu0 %v1267, 40
      %v1274 = vpop.permute.xlu0 %1273
      %1275 = vrot.lane.b32.xlu0 %v1268, 40
      %v1276 = vpop.permute.xlu0 %1275
      %v1277 = vpack.c.b16 %v993, %v1173
      %1278 = vrot.lane.b32.xlu0 %v1196, 48
      %v1279 = vpop.permute.xlu0 %1278
      %1280 = vrot.lane.b32.xlu0 %v1197, 48
      %v1281 = vpop.permute.xlu0 %1280
      %1282 = vrot.lane.b32.xlu0 %v1198, 48
      %v1283 = vpop.permute.xlu0 %1282
      %1284 = vrot.lane.b32.xlu0 %v1277, 48
      %v1285 = vpop.permute.xlu0 %1284
      %v1286 = vpack.c.b16 %v1199, %v1251
      %1287 = vrot.lane.b32.xlu0 %v1208, 56
      %v1288 = vpop.permute.xlu0 %1287
      %1289 = vrot.lane.b32.xlu0 %v1209, 56
      %v1290 = vpop.permute.xlu0 %1289
      %1291 = vrot.lane.b32.xlu0 %v1210, 56
      %v1292 = vpop.permute.xlu0 %1291
      %1293 = vrot.lane.b32.xlu0 %v1286, 56
      %v1294 = vpop.permute.xlu0 %1293
      %v1295 = vpack.c.b16 %v1219, %v1264
      %1296 = vrot.lane.b32.xlu0 %v1228, 64
      %v1297 = vpop.permute.xlu0 %1296
      %1298 = vrot.lane.b32.xlu0 %v1229, 64
      %v1299 = vpop.permute.xlu0 %1298
      %1300 = vrot.lane.b32.xlu0 %v1230, 64
      %v1301 = vpop.permute.xlu0 %1300
      %1302 = vrot.lane.b32.xlu0 %v1295, 64
      %v1303 = vpop.permute.xlu0 %1302
      %v1306 = vsel %vm660, %v1195, %v1212
      %v1309 = vsel %vm660, %v1196, %v1214
      %v1312 = vsel %vm660, %v1197, %v1216
      %v1315 = vsel %vm660, %v1198, %v1218
      %v1317 = vsel %vm678, %v1306, %v1232
      %v1319 = vsel %vm678, %v1309, %v1234
      %v1321 = vsel %vm678, %v1312, %v1236
      %v1323 = vsel %vm678, %v1315, %v1238
      %v1325 = vsel %vm696, %v1317, %v1244
      %v1327 = vsel %vm696, %v1319, %v1246
      %v1329 = vsel %vm696, %v1321, %v1248
      %v1331 = vsel %vm696, %v1323, %v1250
      %v1333 = vsel %vm714, %v1325, %v1257
      %v1335 = vsel %vm714, %v1327, %v1259
      %v1337 = vsel %vm714, %v1329, %v1261
      %v1339 = vsel %vm714, %v1331, %v1263
      %vm1340 = vcmask 326656
      %v1342 = vsel %vm1340, %v1333, %v1270
      %v1344 = vsel %vm1340, %v1335, %v1272
      %v1346 = vsel %vm1340, %v1337, %v1274
      %v1348 = vsel %vm1340, %v1339, %v1276
      %vm1349 = vcmask 392192
      %v1351 = vsel %vm1349, %v1342, %v1279
      %v1353 = vsel %vm1349, %v1344, %v1281
      %v1355 = vsel %vm1349, %v1346, %v1283
      %v1357 = vsel %vm1349, %v1348, %v1285
      %vm1358 = vcmask 457728
      %v1360 = vsel %vm1358, %v1351, %v1288
      %v1362 = vsel %vm1358, %v1353, %v1290
      %v1364 = vsel %vm1358, %v1355, %v1292
      %v1366 = vsel %vm1358, %v1357, %v1294
      %vm1367 = vcmask 523264
      %v1369 = vsel %vm1367, %v1360, %v1297
      %v1371 = vsel %vm1367, %v1362, %v1299
      %v1373 = vsel %vm1367, %v1364, %v1301
      %v1375 = vsel %vm1367, %v1366, %v1303
      %v1376 = vld [vmem:[%s2] sm:$0xf]
      %v1377 = vld [vmem:[%s2 + $0x4] sm:$0xf]
      %v1378 = vld [vmem:[%s2 + $0x8] sm:$0xf]
      %v1379 = vld [vmem:[%s2 + $0xc] sm:$0xf]
      %v1380 = vld [vmem:[%s2 + $0x10] sm:$0xf]
      %v1381 = vld [vmem:[%s2 + $0x14] sm:$0xf]
      %v1382 = vld [vmem:[%s2 + $0x18] sm:$0xf]
      %v1383 = vld [vmem:[%s2 + $0x1c] sm:$0xf]
      %v1384 = vld [vmem:[%s2 + $0x20] sm:$0xf]
      %v1394 = vunpack.c.l.b16 %v1376
      %v1395 = vunpack.c.l.b16 %v1377
      %v1396 = vunpack.c.l.b16 %v1378
      %v1397 = vunpack.c.l.b16 %v1379
      %v1398 = vunpack.c.l.b16 %v1380
      %v1399 = vunpack.c.l.b16 %v1381
      %v1400 = vunpack.c.l.b16 %v1382
      %v1401 = vunpack.c.l.b16 %v1383
      %v1402 = vunpack.c.l.b16 %v1384
      %v1403 = vpack.c.b16 %v1395, %v1394
      %v1404 = vpack.c.b16 %v1397, %v1396
      %v1405 = vpack.c.b16 %v1399, %v1398
      %v1406 = vpack.c.b16 %v1401, %v1400
      %v1407 = vpack.c.b16 %v1402, %v1402
      %vm1412 = vcmask 588800
      %v1413 = vsel %vm1412, %v1369, 0
      %v1415 = vsel %vm1412, %v1371, 0
      %v1417 = vsel %vm1412, %v1373, 0
      %v1419 = vsel %vm1412, %v1375, 0
      %vm1421 = vcmask 1043456
      %v1423 = vsel %vm1421, %v1407, 0
      %1425 = vmatpush.bf16.msra.mxu0 0
      %1426 = vmatpush.bf16.msra.mxu0 0
      %1427 = vmatpush.bf16.msra.mxu0 0
      %1428 = vmatpush.bf16.msra.mxu0 %v1423
      %1429 = vmatpush.bf16.msra.mxu0 %v1406
      %1430 = vmatpush.bf16.msra.mxu0 %v1405
      %1431 = vmatpush.bf16.msra.mxu0 %v1404
      %1432 = vmatpush.bf16.msra.mxu0 %v1403
      %1433 = vmatmul.bf16.gmra.mxu0 %v1413
      %v1434 = vpop.f32.mrf.mxu0
      %v1435 = vadd.f32 0.0, %v1434
      %v1436 = vpop.f32.mrf.mxu0
      %v1437 = vadd.f32 0.0, %v1436
      %1438 = vmatmul.bf16.gmra.mxu0 %v1415
      %v1439 = vpop.f32.mrf.mxu0
      %v1440 = vadd.f32 0.0, %v1439
      %v1441 = vpop.f32.mrf.mxu0
      %v1442 = vadd.f32 0.0, %v1441
      %1443 = vmatmul.bf16.gmra.mxu0 %v1417
      %v1444 = vpop.f32.mrf.mxu0
      %v1445 = vadd.f32 0.0, %v1444
      %v1446 = vpop.f32.mrf.mxu0
      %v1447 = vadd.f32 0.0, %v1446
      %1448 = vmatmul.bf16.gmra.mxu0 %v1419
      %v1449 = vpop.f32.mrf.mxu0
      %v1450 = vadd.f32 0.0, %v1449
      %v1451 = vpop.f32.mrf.mxu0
      %v1452 = vadd.f32 0.0, %v1451
      %1453 = vdwg.mxu0
      %v1454 = vand.u32 2147483647, %v1435
      %v1455 = vand.u32 2147483647, %v1437
      %v1456 = vand.u32 2147483647, %v1440
      %v1457 = vand.u32 2147483647, %v1442
      %v1458 = vand.u32 2147483647, %v1445
      %v1459 = vand.u32 2147483647, %v1447
      %v1460 = vand.u32 2147483647, %v1450
      %v1461 = vand.u32 2147483647, %v1452
      %v1462 = vsub.f32 0.0, %v1454
      %v1463 = vsub.f32 0.0, %v1455
      %v1464 = vsub.f32 0.0, %v1456
      %v1465 = vsub.f32 0.0, %v1457
      %v1466 = vsub.f32 0.0, %v1458
      %v1467 = vsub.f32 0.0, %v1459
      %v1468 = vsub.f32 0.0, %v1460
      %v1469 = vsub.f32 0.0, %v1461
      %v1470 = vmul.f32 %v1462, 1.442695
      %v1471 = vpow.pop %v1470
      %v1472 = vmul.f32 %v1463, 1.442695
      %v1473 = vpow.pop %v1472
      %v1474 = vmul.f32 %v1464, 1.442695
      %v1475 = vpow.pop %v1474
      %v1476 = vmul.f32 %v1465, 1.442695
      %v1477 = vpow.pop %v1476
      %v1478 = vmul.f32 %v1466, 1.442695
      %v1479 = vpow.pop %v1478
      %v1480 = vmul.f32 %v1467, 1.442695
      %v1481 = vpow.pop %v1480
      %v1482 = vmul.f32 %v1468, 1.442695
      %v1483 = vpow.pop %v1482
      %v1484 = vmul.f32 %v1469, 1.442695
      %v1485 = vpow.pop %v1484
      %v1486 = vadd.f32 %v1471, 1.0
      %v1487 = vadd.f32 %v1473, 1.0
      %v1488 = vadd.f32 %v1475, 1.0
      %v1489 = vadd.f32 %v1477, 1.0
      %v1490 = vadd.f32 %v1479, 1.0
      %v1491 = vadd.f32 %v1481, 1.0
      %v1492 = vadd.f32 %v1483, 1.0
      %v1493 = vadd.f32 %v1485, 1.0
      %v1494 = vrcp.pop %v1486
      %v1495 = vrcp.pop %v1487
      %v1496 = vrcp.pop %v1488
      %v1497 = vrcp.pop %v1489
      %v1498 = vrcp.pop %v1490
      %v1499 = vrcp.pop %v1491
      %v1500 = vrcp.pop %v1492
      %v1501 = vrcp.pop %v1493
      %vm1502 = vcmp.ge.f32.partialorder %v1435, 0.0
      %vm1503 = vcmp.ge.f32.partialorder %v1437, 0.0
      %vm1504 = vcmp.ge.f32.partialorder %v1440, 0.0
      %vm1505 = vcmp.ge.f32.partialorder %v1442, 0.0
      %vm1506 = vcmp.ge.f32.partialorder %v1445, 0.0
      %vm1507 = vcmp.ge.f32.partialorder %v1447, 0.0
      %vm1508 = vcmp.ge.f32.partialorder %v1450, 0.0
      %vm1509 = vcmp.ge.f32.partialorder %v1452, 0.0
      %v1510 = vsel %vm1502, 1.0, %v1471
      %v1511 = vsel %vm1503, 1.0, %v1473
      %v1512 = vsel %vm1504, 1.0, %v1475
      %v1513 = vsel %vm1505, 1.0, %v1477
      %v1514 = vsel %vm1506, 1.0, %v1479
      %v1515 = vsel %vm1507, 1.0, %v1481
      %v1516 = vsel %vm1508, 1.0, %v1483
      %v1517 = vsel %vm1509, 1.0, %v1485
      %v1518 = vmul.f32 %v1510, %v1494
      %v1519 = vmul.f32 %v1511, %v1495
      %v1520 = vmul.f32 %v1512, %v1496
      %v1521 = vmul.f32 %v1513, %v1497
      %v1522 = vmul.f32 %v1514, %v1498
      %v1523 = vmul.f32 %v1515, %v1499
      %v1524 = vmul.f32 %v1516, %v1500
      %v1525 = vmul.f32 %v1517, %v1501
      %v1526 = vsub.f32 %v1471, 1.0
      %v1527 = vsub.f32 %v1473, 1.0
      %v1528 = vsub.f32 %v1475, 1.0
      %v1529 = vsub.f32 %v1477, 1.0
      %v1530 = vsub.f32 %v1479, 1.0
      %v1531 = vsub.f32 %v1481, 1.0
      %v1532 = vsub.f32 %v1483, 1.0
      %v1533 = vsub.f32 %v1485, 1.0
      %v1534 = vsel %vm1502, %v1435, %v1526
      %v1535 = vsel %vm1503, %v1437, %v1527
      %v1536 = vsel %vm1504, %v1440, %v1528
      %v1537 = vsel %vm1505, %v1442, %v1529
      %v1538 = vsel %vm1506, %v1445, %v1530
      %v1539 = vsel %vm1507, %v1447, %v1531
      %v1540 = vsel %vm1508, %v1450, %v1532
      %v1541 = vsel %vm1509, %v1452, %v1533
      %v1542 = vmul.f32 %v1534, %v1518
      %v1543 = vmul.f32 %v1535, %v1519
      %v1544 = vmul.f32 %v1536, %v1520
      %v1545 = vmul.f32 %v1537, %v1521
      %v1546 = vmul.f32 %v1538, %v1522
      %v1547 = vmul.f32 %v1539, %v1523
      %v1548 = vmul.f32 %v1540, %v1524
      %v1549 = vmul.f32 %v1541, %v1525
      %1550 = vxpose.xlu0.b32.start [1/16] %v1542, 128
      %1551 = vxpose.xlu0.b32.cont [2/16] %v1543, 128
      %1552 = vxpose.xlu0.b32.cont [3/16] %v1544, 128
      %1553 = vxpose.xlu0.b32.cont [4/16] %v1545, 128
      %1554 = vxpose.xlu0.b32.cont [5/16] %v1546, 128
      %1555 = vxpose.xlu0.b32.cont [6/16] %v1547, 128
      %1556 = vxpose.xlu0.b32.cont [7/16] %v1548, 128
      %1557 = vxpose.xlu0.b32.cont [8/16] %v1549, 128
      %1558 = vxpose.xlu0.b32.cont [9/16] 0.0, 128
      %1559 = vxpose.xlu0.b32.cont [10/16] 0.0, 128
      %1560 = vxpose.xlu0.b32.cont [11/16] 0.0, 128
      %1561 = vxpose.xlu0.b32.cont [12/16] 0.0, 128
      %1562 = vxpose.xlu0.b32.cont [13/16] 0.0, 128
      %1563 = vxpose.xlu0.b32.cont [14/16] 0.0, 128
      %1564 = vxpose.xlu0.b32.cont [15/16] 0.0, 128
      %1565 = vxpose.xlu0.b32.end [16/16] 0.0, 128
      %v1566 = vpop.trf.xlu0
      %v1567 = vpop.trf.xlu0
      %v1568 = vpop.trf.xlu0
      %v1569 = vpop.trf.xlu0
      %v1570 = vpop.trf.xlu0
      %v1571 = vpop.trf.xlu0
      %v1572 = vpop.trf.xlu0
      %v1573 = vpop.trf.xlu0
      %v1574 = vpop.trf.xlu0
      %v1575 = vpop.trf.xlu0
      %v1576 = vpop.trf.xlu0
      %v1577 = vpop.trf.xlu0
      %v1578 = vpop.trf.xlu0
      %v1579 = vpop.trf.xlu0
      %v1580 = vpop.trf.xlu0
      %v1581 = vpop.trf.xlu0
      %1582 = vst.msk [vmem:[%s168] sm:$0xff] %vm1367, %v1566
      %p1583 = scmp.lt.s32.totalorder %s14, 1
      %s1584 = scalar_select %p1583, %s14, 1
      %s1585 = smul.addr %s1584, 8
      %s1586 = scalar_lea.vmem %s3, %s1585
      // Predicated region
      $region33: #{downsample_forward.1} parent=31 // pred_check
        %p1587 = pneg %p100
      $region34: #{downsample_forward.1} parent=31 // pred_check_branch
        %1589 = sbr.rel (%p1587) target = $region36
      $region35: #{downsample_forward.1} parent=31 // pred_region
        _
      $region36: #{downsample_forward.1} parent=31 // pred_fallthru
        _
    $region32: #{downsample_forward.1} parent=5 // pred_fallthru
      _
    %p1590 = scmp.le.s32.totalorder 2, %s9
    // Predicated region
    $region37: #{downsample_forward.1} parent=5 // pred_check
      %p1591 = pneg %p1590
    $region38: #{downsample_forward.1} parent=5 // pred_check_branch
      %1593 = sbr.rel (%p1591) target = $region40
    $region39: #{downsample_forward.1} parent=5 // pred_region
      %s1594 = ssub.s32 %s9, 2
      // Predicated region
      $region41: #{downsample_forward.1} parent=39 // pred_check
        %p1595 = pneg %p106
      $region42: #{downsample_forward.1} parent=39 // pred_check_branch
        %1597 = sbr.rel (%p1595) target = $region44
      $region43: #{downsample_forward.1} parent=39 // pred_region
        %p1598 = scmp.lt.s32.totalorder %s15, 1
        %s1599 = scalar_select %p1598, %s15, 1
        %s1600 = smul.addr %s1599, 8
        %s1601 = scalar_lea.vmem %s3, %s1600
      $region44: #{downsample_forward.1} parent=39 // pred_fallthru
        _
    $region40: #{downsample_forward.1} parent=5 // pred_fallthru
      _
  $region6: #{downsample_forward.1} parent=0 // loop_footer
    %s13 = sadd.s32 1, %s9
  $region7: #{downsample_forward.1} parent=0 // loop_footer_branch
    %8 = sbr.rel target = $region3
  $region8: #{downsample_forward.1} parent=0 // loop_exit
    _

</llo_original>
